<compile_context>
chip_gen: v7x
topology: tpu7x:2x2x1
jax: 0.10.0
libtpu: 0.0.40
codegen_flags: <defaults>
</compile_context>

<pallas_src>
import functools

import jax
import jax.numpy as jnp
from jax.experimental import pallas as pl
from jax.experimental.pallas import tpu as pltpu


# ----------------------------------------------------------------------------
# Fused forward-pass kernel
# ----------------------------------------------------------------------------
def _gcn_fused_kernel(
    idx_ref,        # (3, P) int32: [row; col; batch], padded with -1
    x_ref,          # (N, Fx+Fe+2) augmented node features  [x | 0 | 1 | 0]
    eattr_ref,      # (E, Fx+Fe+2) augmented edge features  [0 | e | 0 | 1]
    embw_ref,       # (Fx+Fe+2, D) packed [x_emb_w; edge_emb_w; x_emb_b; edge_emb_b]
    linw_ref,       # (L, D, D)   GCNConv linear weights
    lvec_ref,       # (L, 4, D)   packed per-layer [lin_b, root, bn_scale, bn_shift]
    headw_ref,      # (D+H, H)    packed [pred_w1; pred_w2]
    headv_ref,      # (4, H)      packed [pred_b1; pred_b2; pred_w3^T; pred_b3@[3,0]]
    out_ref,        # (G, 1)
    *, num_layers, num_nodes, num_edges, num_graphs, emb_dim):
    f32, bf16 = jnp.float32, jnp.bfloat16
    N, E, G, D = num_nodes, num_edges, num_graphs, emb_dim
    H = D // 2

    # ---- graph structure: exact 0/1 one-hots, built once, VMEM/vreg resident ---
    idx = idx_ref[...]
    row_1e = idx[0:1, :E]                                    # (1,E)
    col_1e = idx[1:2, :E]                                    # (1,E)
    bat_1n = idx[2:3, :N]                                    # (1,N)

    iota_ne = jax.lax.broadcasted_iota(jnp.int32, (N, E), 0)
    R = (row_1e == iota_ne).astype(f32)                      # (N,E)  R[n,e] = [row[e]==n]
    S = (col_1e == iota_ne).astype(f32)                      # (N,E)  S[n,e] = [col[e]==n]
    R_bf = R.astype(bf16)                                    # exact 0/1 in bf16
    S_bf = S.astype(bf16)

    deg = jnp.sum(R, axis=1, keepdims=True) + 1.0            # (N,1) degree(row)+1 (>=1)
    dis = jax.lax.rsqrt(deg)                                 # deg^-0.5
    inv_deg = pl.reciprocal(deg, approx=True)                # EUP slot
    # per-edge dis[row[e]] as (E,1) via MXU: R^T @ dis
    dis_row = jax.lax.dot_general(R, dis, (((0,), (0,)), ((), ())),
                                  preferred_element_type=f32)

    # ---- input embeddings (biases fused via ones-columns of augmented inputs) --
    embw = embw_ref[...]
    h = jnp.dot(x_ref[...], embw, preferred_element_type=f32)       # (N,D) = x@Wx + bx
    ea = jnp.dot(eattr_ref[...], embw, preferred_element_type=f32)  # (E,D) = e@We + be

    # ---- GCN layers (statically unrolled; everything stays in VMEM/vregs) ------
    for li in range(num_layers):
        lv = lvec_ref[li]                                    # (4,D)
        lin_b, root = lv[0:1, :], lv[1:2, :]
        bn_scale, bn_shift = lv[2:3, :], lv[3:4, :]

        h_in = h
        x_lin = jnp.dot(h, linw_ref[li], preferred_element_type=f32) + lin_b   # (N,D)
        # gather x_lin[row]: (E,D) = R^T @ x_lin  (bf16 MXU, one-hot exact)
        x_j = jax.lax.dot_general(R_bf, x_lin.astype(bf16),
                                  (((0,), (0,)), ((), ())),
                                  preferred_element_type=f32)
        # message: norm[e]*relu(x_j+ea); dis[row] applied per edge (VPU),
        # dis[col] applied per destination node after the scatter.
        msg = jnp.maximum(x_j + ea, 0.0) * dis_row                              # (E,D)
        aggr = jnp.dot(S_bf, msg.astype(bf16), preferred_element_type=f32) * dis  # (N,D)
        conv = aggr + jnp.maximum(x_lin + root, 0.0) * inv_deg
        h = h_in + conv                                                          # residual
        h = h * bn_scale + bn_shift                          # BatchNorm1d (eval), pre-folded
        if li != num_layers - 1:
            h = jnp.maximum(h, 0.0)
        # TODO(synk): F.dropout skipped (inference mode, training=False -> identity)

    # ---- global mean pool + prediction head -------------------------------------
    iota_gn = jax.lax.broadcasted_iota(jnp.int32, (G, N), 0)
    Pf = (bat_1n == iota_gn).astype(f32)                                         # (G,N)
    cnt = jnp.maximum(jnp.sum(Pf, axis=1, keepdims=True), 1.0)
    pooled = jnp.dot(Pf.astype(bf16), h.astype(bf16), preferred_element_type=f32)
    pooled = pooled * pl.reciprocal(cnt, approx=True)                            # (G,D)

    headw = headw_ref[...]
    w1 = headw[0:D, :]                                                           # (D,H)
    w2 = headw[D:D + H, :]                                                       # (H,H)
    hv = headv_ref[...]
    b1, b2 = hv[0:1, :], hv[1:2, :]
    w3_row = hv[2:3, :]                                                          # (1,H)
    b3 = hv[3:4, 0:1]                                                            # (1,1)

    z = jnp.maximum(jnp.dot(pooled, w1, preferred_element_type=f32) + b1, 0.0)
    z = jnp.maximum(jnp.dot(z, w2, preferred_element_type=f32) + b2, 0.0)
    out_ref[...] = jnp.sum(z * w3_row, axis=-1, keepdims=True) + b3


def _full_block_spec(shape):
    zero_idx = (0,) * len(shape)
    return pl.BlockSpec(tuple(int(s) for s in shape), lambda i, _z=zero_idx: _z)


def gcn_forward(packed, x, edge_index, edge_attr, batch, num_graphs):
    """Single fused pallas_call for the whole GCN forward pass (eval mode)."""
    N, Fx = x.shape
    E, Fe = edge_attr.shape
    G = int(num_graphs)
    L, D, _ = packed["lin_w"].shape

    # ---- pack the dynamic inputs to minimise input-DMA count -------------------
    P = max(E, N)
    row = edge_index[0].astype(jnp.int32)
    col = edge_index[1].astype(jnp.int32)
    idx = jnp.full((3, P), -1, jnp.int32)
    idx = idx.at[0, :E].set(row).at[1, :E].set(col).at[2, :N].set(batch.astype(jnp.int32))

    xf = x.astype(jnp.float32)
    ef = edge_attr.astype(jnp.float32)
    x_aug = jnp.concatenate(
        [xf, jnp.zeros((N, Fe), jnp.float32),
         jnp.ones((N, 1), jnp.float32), jnp.zeros((N, 1), jnp.float32)], axis=1)
    e_aug = jnp.concatenate(
        [jnp.zeros((E, Fx), jnp.float32), ef,
         jnp.zeros((E, 1), jnp.float32), jnp.ones((E, 1), jnp.float32)], axis=1)

    inputs = (idx, x_aug, e_aug, packed["emb_w"], packed["lin_w"],
              packed["layer_vecs"], packed["head_w"], packed["head_v"])

    kernel = functools.partial(
        _gcn_fused_kernel, num_layers=L, num_nodes=N, num_edges=E,
        num_graphs=G, emb_dim=D)

    # TODO(synk): for serving many graph-batches, add a real 'parallel' grid axis
    # over batches (2 TCs on v7x) and switch the scatter to an SMEM-indexed tiled
    # form before scaling N/E up (v7x VMEM is 64 MiB).
    return pl.pallas_call(
        kernel,
        out_shape=jax.ShapeDtypeStruct((G, 1), jnp.float32),
        grid=(1,),
        in_specs=[_full_block_spec(a.shape) for a in inputs],
        out_specs=_full_block_spec((G, 1)),
        compiler_params=pltpu.CompilerParams(
            dimension_semantics=("arbitrary",),
            vmem_limit_bytes=32 * 1024 * 1024),
    )(*inputs)


# ----------------------------------------------------------------------------
# Parameters (deterministic, synthetic) + host-side packing / BN folding
# ----------------------------------------------------------------------------
def init_params(key, emb_dim=128, num_layers=5, in_feat=40, edge_feat=10):
    ks = iter(jax.random.split(key, 64))
    D = emb_dim

    def lin(k, fan_in, fan_out, kaiming=False):
        std = (2.0 / fan_in) ** 0.5 if kaiming else (1.0 / fan_in) ** 0.5
        w = jax.random.normal(k, (fan_in, fan_out), jnp.float32) * std
        b = jax.random.normal(jax.random.fold_in(k, 1), (1, fan_out), jnp.float32) * 0.01
        return w, b

    p = {}
    p["x_emb_w"], p["x_emb_b"] = lin(next(ks), in_feat, D, kaiming=True)
    p["edge_emb_w"], p["edge_emb_b"] = lin(next(ks), edge_feat, D, kaiming=True)

    lw, lb, root, gm, bt, mn, vr = [], [], [], [], [], [], []
    for _ in range(num_layers):
        w, b = lin(next(ks), D, D)
        lw.append(w)
        lb.append(b)
        root.append(jax.random.normal(next(ks), (1, D), jnp.float32))        # nn.Embedding(1, D)
        gm.append(1.0 + 0.1 * jax.random.normal(next(ks), (1, D), jnp.float32))
        bt.append(0.1 * jax.random.normal(next(ks), (1, D), jnp.float32))
        mn.append(0.1 * jax.random.normal(next(ks), (1, D), jnp.float32))
        vr.append(0.5 + jax.random.uniform(next(ks), (1, D), jnp.float32))
    p["lin_w"] = jnp.stack(lw)          # (L, D, D)
    p["lin_b"] = jnp.stack(lb)          # (L, 1, D)
    p["root"] = jnp.stack(root)         # (L, 1, D)
    p["bn_gamma"] = jnp.stack(gm)
    p["bn_beta"] = jnp.stack(bt)
    p["bn_mean"] = jnp.stack(mn)
    p["bn_var"] = jnp.stack(vr)

    half = D // 2
    p["pred_w1"], p["pred_b1"] = lin(next(ks), D, half)
    p["pred_w2"], p["pred_b2"] = lin(next(ks), half, half)
    p["pred_w3"], p["pred_b3"] = lin(next(ks), half, 1)
    return p


def pack_params(p, bn_eps=1e-5):
    """Fold BatchNorm (eval) into scale/shift and pack parameters into few arrays."""
    L, D, _ = p["lin_w"].shape
    H = D // 2
    emb_w = jnp.concatenate(
        [p["x_emb_w"], p["edge_emb_w"], p["x_emb_b"], p["edge_emb_b"]], axis=0)   # (Fx+Fe+2, D)
    bn_scale = p["bn_gamma"] * jax.lax.rsqrt(p["bn_var"] + bn_eps)                # (L,1,D)
    bn_shift = p["bn_beta"] - p["bn_mean"] * bn_scale
    layer_vecs = jnp.concatenate(
        [p["lin_b"], p["root"], bn_scale, bn_shift], axis=1)                      # (L,4,D)
    head_w = jnp.concatenate([p["pred_w1"], p["pred_w2"]], axis=0)                # (D+H, H)
    w3_row = p["pred_w3"].reshape(1, H)
    b3_row = jnp.zeros((1, H), jnp.float32).at[0, 0].set(p["pred_b3"][0, 0])
    head_v = jnp.concatenate([p["pred_b1"], p["pred_b2"], w3_row, b3_row], axis=0)  # (4, H)
    return {"emb_w": emb_w, "lin_w": p["lin_w"], "layer_vecs": layer_vecs,
            "head_w": head_w, "head_v": head_v}


# ----------------------------------------------------------------------------
# Pure-JAX reference (for correctness check)
# ----------------------------------------------------------------------------
def gcn_reference(params, x, edge_index, edge_attr, batch, num_graphs):
    HI = jax.lax.Precision.HIGHEST
    row, col = edge_index[0], edge_index[1]
    N = x.shape[0]
    h = jnp.dot(x, params["x_emb_w"], precision=HI) + params["x_emb_b"]
    ea = jnp.dot(edge_attr, params["edge_emb_w"], precision=HI) + params["edge_emb_b"]
    deg = jnp.zeros((N,), jnp.float32).at[row].add(1.0) + 1.0
    dis = deg ** -0.5
    norm = dis[row] * dis[col]
    L = params["lin_w"].shape[0]
    for li in range(L):
        h_in = h
        x_lin = jnp.dot(h, params["lin_w"][li], precision=HI) + params["lin_b"][li]
        x_j = x_lin[row]
        msg = norm[:, None] * jnp.maximum(x_j + ea, 0.0)
        aggr = jnp.zeros_like(x_lin).at[col].add(msg)
        conv = aggr + jnp.maximum(x_lin + params["root"][li], 0.0) / deg[:, None]
        h = h_in + conv
        inv_std = 1.0 / jnp.sqrt(params["bn_var"][li] + 1e-5)
        h = (h - params["bn_mean"][li]) * (params["bn_gamma"][li] * inv_std) + params["bn_beta"][li]
        if li != L - 1:
            h = jnp.maximum(h, 0.0)
    onehot = jax.nn.one_hot(batch, num_graphs, dtype=jnp.float32).T          # (G, N)
    cnt = jnp.maximum(onehot.sum(axis=1, keepdims=True), 1.0)
    pooled = jnp.dot(onehot / cnt, h, precision=HI)
    z = jnp.maximum(jnp.dot(pooled, params["pred_w1"], precision=HI) + params["pred_b1"], 0.0)
    z = jnp.maximum(jnp.dot(z, params["pred_w2"], precision=HI) + params["pred_b2"], 0.0)
    return jnp.dot(z, params["pred_w3"], precision=HI) + params["pred_b3"]


# ----------------------------------------------------------------------------
# Example run
# ----------------------------------------------------------------------------
if __name__ == "__main__":
    key = jax.random.PRNGKey(0)
    k_x, k_e, k_ei, k_p = jax.random.split(key, 4)

    NUM_NODES = 16
    NUM_EDGES = 40
    NUM_GRAPHS = 2
    EMB_DIM = 128          # lane-dense feature axis
    NUM_LAYERS = 5

    x = jax.random.normal(k_x, (NUM_NODES, 40), jnp.float32)          # data.x (float-cast)
    edge_attr = jax.random.normal(k_e, (NUM_EDGES, 10), jnp.float32)  # data.edge_attr
    edge_index = jax.random.randint(k_ei, (2, NUM_EDGES), 0, NUM_NODES, jnp.int32)
    batch = jnp.concatenate([jnp.zeros(NUM_NODES // 2, jnp.int32),
                             jnp.ones(NUM_NODES - NUM_NODES // 2, jnp.int32)])

    params = init_params(k_p, emb_dim=EMB_DIM, num_layers=NUM_LAYERS)
    packed = pack_params(params)

    fwd = jax.jit(gcn_forward, static_argnums=(5,))
    out = fwd(packed, x, edge_index, edge_attr, batch, NUM_GRAPHS)
    out = jax.block_until_ready(out)
    assert out.shape == (NUM_GRAPHS, 1)

    ref = gcn_reference(params, x, edge_index, edge_attr, batch, NUM_GRAPHS)
    assert jnp.all(jnp.isfinite(out))
    assert jnp.allclose(out, ref, rtol=3e-2, atol=3e-2)

    print("KERNEL_OK")
</pallas_src>

<mosaic_0001>
module attributes {stable_mosaic.version = 11 : i64} {
  func.func @_gcn_fused_kernel(%arg0: i32, %arg1: memref<3x40xi32, #tpu.memory_space<vmem>>, %arg2: memref<16x52xf32, #tpu.memory_space<vmem>>, %arg3: memref<40x52xf32, #tpu.memory_space<vmem>>, %arg4: memref<52x128xf32, #tpu.memory_space<vmem>>, %arg5: memref<5x128x128xf32, #tpu.memory_space<vmem>>, %arg6: memref<5x4x128xf32, #tpu.memory_space<vmem>>, %arg7: memref<192x64xf32, #tpu.memory_space<vmem>>, %arg8: memref<4x64xf32, #tpu.memory_space<vmem>>, %arg9: memref<2x1xf32, #tpu.memory_space<vmem>>) attributes {dimension_semantics = [#tpu.dimension_semantics<arbitrary>], iteration_bounds = array<i64: 1>, scalar_prefetch = 0 : i64, scratch_operands = 0 : i64, tpu.core_type = #tpu.core_type<tc>, window_params = [{pipeline_mode = #tpu.pipeline_mode<synchronous>, transform_indices = @transform_0, window_bounds = array<i64: 3, 40>}, {pipeline_mode = #tpu.pipeline_mode<synchronous>, transform_indices = @transform_1, window_bounds = array<i64: 16, 52>}, {pipeline_mode = #tpu.pipeline_mode<synchronous>, transform_indices = @transform_2, window_bounds = array<i64: 40, 52>}, {pipeline_mode = #tpu.pipeline_mode<synchronous>, transform_indices = @transform_3, window_bounds = array<i64: 52, 128>}, {pipeline_mode = #tpu.pipeline_mode<synchronous>, transform_indices = @transform_4, window_bounds = array<i64: 5, 128, 128>}, {pipeline_mode = #tpu.pipeline_mode<synchronous>, transform_indices = @transform_5, window_bounds = array<i64: 5, 4, 128>}, {pipeline_mode = #tpu.pipeline_mode<synchronous>, transform_indices = @transform_6, window_bounds = array<i64: 192, 64>}, {pipeline_mode = #tpu.pipeline_mode<synchronous>, transform_indices = @transform_7, window_bounds = array<i64: 4, 64>}, {pipeline_mode = #tpu.pipeline_mode<synchronous>, transform_indices = @transform_8, window_bounds = array<i64: 2, 1>}]} {
    %c0 = arith.constant 0 : index
    %c0_0 = arith.constant 0 : index
    %0 = vector.load %arg1[%c0, %c0_0] : memref<3x40xi32, #tpu.memory_space<vmem>>, vector<3x40xi32>
    %1 = vector.extract_strided_slice %0 {offsets = [0, 0], sizes = [1, 40], strides = [1, 1]} : vector<3x40xi32> to vector<1x40xi32>
    %2 = vector.extract_strided_slice %0 {offsets = [1, 0], sizes = [1, 40], strides = [1, 1]} : vector<3x40xi32> to vector<1x40xi32>
    %3 = vector.extract_strided_slice %0 {offsets = [2, 0], sizes = [1, 16], strides = [1, 1]} : vector<3x40xi32> to vector<1x16xi32>
    %4 = tpu.iota {dimensions = array<i32: 0>} : vector<16x40xi32>
    %5 = vector.broadcast %1 : vector<1x40xi32> to vector<16x40xi32>
    %6 = arith.cmpi eq, %5, %4 : vector<16x40xi32>
    %7 = arith.extui %6 : vector<16x40xi1> to vector<16x40xi32>
    %8 = arith.sitofp %7 : vector<16x40xi32> to vector<16x40xf32>
    %9 = vector.broadcast %2 : vector<1x40xi32> to vector<16x40xi32>
    %10 = arith.cmpi eq, %9, %4 : vector<16x40xi32>
    %11 = arith.extui %10 : vector<16x40xi1> to vector<16x40xi32>
    %12 = arith.sitofp %11 : vector<16x40xi32> to vector<16x40xf32>
    %13 = arith.truncf %8 : vector<16x40xf32> to vector<16x40xbf16>
    %14 = arith.truncf %12 : vector<16x40xf32> to vector<16x40xbf16>
    %cst = arith.constant dense<0.000000e+00> : vector<16xf32>
    %15 = vector.multi_reduction <add>, %8, %cst [1] : vector<16x40xf32> to vector<16xf32>
    %16 = vector.shape_cast %15 : vector<16xf32> to vector<16x1xf32>
    %cst_1 = arith.constant 1.000000e+00 : f32
    %17 = vector.broadcast %cst_1 : f32 to vector<16x1xf32>
    %18 = arith.addf %16, %17 : vector<16x1xf32>
    %19 = math.rsqrt %18 : vector<16x1xf32>
    %20 = tpu.reciprocal %18 {approx = true} : vector<16x1xf32> -> vector<16x1xf32>
    %cst_2 = arith.constant dense<0.000000e+00> : vector<40x1xf32>
    %21 = tpu.matmul %8, %19, %cst_2 {dimension_numbers = #tpu.dot_dimension_numbers<[0], [0], [1], [1], [0, 1, 1, 1], [], []>} : vector<16x40xf32>, vector<16x1xf32>, vector<40x1xf32> -> vector<40x1xf32>
    %c0_3 = arith.constant 0 : index
    %c0_4 = arith.constant 0 : index
    %22 = vector.load %arg4[%c0_3, %c0_4] : memref<52x128xf32, #tpu.memory_space<vmem>>, vector<52x128xf32>
    %c0_5 = arith.constant 0 : index
    %c0_6 = arith.constant 0 : index
    %23 = vector.load %arg2[%c0_5, %c0_6] : memref<16x52xf32, #tpu.memory_space<vmem>>, vector<16x52xf32>
    %cst_7 = arith.constant dense<0.000000e+00> : vector<16x128xf32>
    %24 = tpu.matmul %23, %22, %cst_7 {dimension_numbers = #tpu.dot_dimension_numbers<[1], [0], [0], [1], [0, 0, 1, 1], [], []>} : vector<16x52xf32>, vector<52x128xf32>, vector<16x128xf32> -> vector<16x128xf32>
    %c0_8 = arith.constant 0 : index
    %c0_9 = arith.constant 0 : index
    %25 = vector.load %arg3[%c0_8, %c0_9] : memref<40x52xf32, #tpu.memory_space<vmem>>, vector<40x52xf32>
    %cst_10 = arith.constant dense<0.000000e+00> : vector<40x128xf32>
    %26 = tpu.matmul %25, %22, %cst_10 {dimension_numbers = #tpu.dot_dimension_numbers<[1], [0], [0], [1], [0, 0, 1, 1], [], []>} : vector<40x52xf32>, vector<52x128xf32>, vector<40x128xf32> -> vector<40x128xf32>
    %c0_11 = arith.constant 0 : index
    %c0_12 = arith.constant 0 : index
    %c0_13 = arith.constant 0 : index
    %27 = vector.load %arg6[%c0_11, %c0_12, %c0_13] : memref<5x4x128xf32, #tpu.memory_space<vmem>>, vector<1x4x128xf32>
    %28 = vector.shape_cast %27 : vector<1x4x128xf32> to vector<4x128xf32>
    %29 = vector.extract_strided_slice %28 {offsets = [0, 0], sizes = [1, 128], strides = [1, 1]} : vector<4x128xf32> to vector<1x128xf32>
    %30 = vector.extract_strided_slice %28 {offsets = [1, 0], sizes = [1, 128], strides = [1, 1]} : vector<4x128xf32> to vector<1x128xf32>
    %31 = vector.extract_strided_slice %28 {offsets = [2, 0], sizes = [1, 128], strides = [1, 1]} : vector<4x128xf32> to vector<1x128xf32>
    %32 = vector.extract_strided_slice %28 {offsets = [3, 0], sizes = [1, 128], strides = [1, 1]} : vector<4x128xf32> to vector<1x128xf32>
    %c0_14 = arith.constant 0 : index
    %c0_15 = arith.constant 0 : index
    %c0_16 = arith.constant 0 : index
    %33 = vector.load %arg5[%c0_14, %c0_15, %c0_16] : memref<5x128x128xf32, #tpu.memory_space<vmem>>, vector<1x128x128xf32>
    %34 = vector.shape_cast %33 : vector<1x128x128xf32> to vector<128x128xf32>
    %cst_17 = arith.constant dense<0.000000e+00> : vector<16x128xf32>
    %35 = tpu.matmul %24, %34, %cst_17 {dimension_numbers = #tpu.dot_dimension_numbers<[1], [0], [0], [1], [0, 0, 1, 1], [], []>} : vector<16x128xf32>, vector<128x128xf32>, vector<16x128xf32> -> vector<16x128xf32>
    %36 = vector.broadcast %29 : vector<1x128xf32> to vector<16x128xf32>
    %37 = arith.addf %35, %36 : vector<16x128xf32>
    %38 = arith.truncf %37 : vector<16x128xf32> to vector<16x128xbf16>
    %cst_18 = arith.constant dense<0.000000e+00> : vector<40x128xf32>
    %39 = tpu.matmul %13, %38, %cst_18 {dimension_numbers = #tpu.dot_dimension_numbers<[0], [0], [1], [1], [0, 1, 1, 1], [], []>} : vector<16x40xbf16>, vector<16x128xbf16>, vector<40x128xf32> -> vector<40x128xf32>
    %40 = arith.addf %39, %26 : vector<40x128xf32>
    %cst_19 = arith.constant 0.000000e+00 : f32
    %41 = vector.broadcast %cst_19 : f32 to vector<40x128xf32>
    %42 = arith.maximumf %40, %41 : vector<40x128xf32>
    %43 = vector.broadcast %21 : vector<40x1xf32> to vector<40x128xf32>
    %44 = arith.mulf %42, %43 : vector<40x128xf32>
    %45 = arith.truncf %44 : vector<40x128xf32> to vector<40x128xbf16>
    %cst_20 = arith.constant dense<0.000000e+00> : vector<16x128xf32>
    %46 = tpu.matmul %14, %45, %cst_20 {dimension_numbers = #tpu.dot_dimension_numbers<[1], [0], [0], [1], [0, 0, 1, 1], [], []>} : vector<16x40xbf16>, vector<40x128xbf16>, vector<16x128xf32> -> vector<16x128xf32>
    %47 = vector.broadcast %19 : vector<16x1xf32> to vector<16x128xf32>
    %48 = arith.mulf %46, %47 : vector<16x128xf32>
    %49 = vector.broadcast %30 : vector<1x128xf32> to vector<16x128xf32>
    %50 = arith.addf %37, %49 : vector<16x128xf32>
    %cst_21 = arith.constant 0.000000e+00 : f32
    %51 = vector.broadcast %cst_21 : f32 to vector<16x128xf32>
    %52 = arith.maximumf %50, %51 : vector<16x128xf32>
    %53 = vector.broadcast %20 : vector<16x1xf32> to vector<16x128xf32>
    %54 = arith.mulf %52, %53 : vector<16x128xf32>
    %55 = arith.addf %48, %54 : vector<16x128xf32>
    %56 = arith.addf %24, %55 : vector<16x128xf32>
    %57 = vector.broadcast %31 : vector<1x128xf32> to vector<16x128xf32>
    %58 = arith.mulf %56, %57 : vector<16x128xf32>
    %59 = vector.broadcast %32 : vector<1x128xf32> to vector<16x128xf32>
    %60 = arith.addf %58, %59 : vector<16x128xf32>
    %cst_22 = arith.constant 0.000000e+00 : f32
    %61 = vector.broadcast %cst_22 : f32 to vector<16x128xf32>
    %62 = arith.maximumf %60, %61 : vector<16x128xf32>
    %c1 = arith.constant 1 : index
    %c0_23 = arith.constant 0 : index
    %c0_24 = arith.constant 0 : index
    %63 = vector.load %arg6[%c1, %c0_23, %c0_24] : memref<5x4x128xf32, #tpu.memory_space<vmem>>, vector<1x4x128xf32>
    %64 = vector.shape_cast %63 : vector<1x4x128xf32> to vector<4x128xf32>
    %65 = vector.extract_strided_slice %64 {offsets = [0, 0], sizes = [1, 128], strides = [1, 1]} : vector<4x128xf32> to vector<1x128xf32>
    %66 = vector.extract_strided_slice %64 {offsets = [1, 0], sizes = [1, 128], strides = [1, 1]} : vector<4x128xf32> to vector<1x128xf32>
    %67 = vector.extract_strided_slice %64 {offsets = [2, 0], sizes = [1, 128], strides = [1, 1]} : vector<4x128xf32> to vector<1x128xf32>
    %68 = vector.extract_strided_slice %64 {offsets = [3, 0], sizes = [1, 128], strides = [1, 1]} : vector<4x128xf32> to vector<1x128xf32>
    %c1_25 = arith.constant 1 : index
    %c0_26 = arith.constant 0 : index
    %c0_27 = arith.constant 0 : index
    %69 = vector.load %arg5[%c1_25, %c0_26, %c0_27] : memref<5x128x128xf32, #tpu.memory_space<vmem>>, vector<1x128x128xf32>
    %70 = vector.shape_cast %69 : vector<1x128x128xf32> to vector<128x128xf32>
    %cst_28 = arith.constant dense<0.000000e+00> : vector<16x128xf32>
    %71 = tpu.matmul %62, %70, %cst_28 {dimension_numbers = #tpu.dot_dimension_numbers<[1], [0], [0], [1], [0, 0, 1, 1], [], []>} : vector<16x128xf32>, vector<128x128xf32>, vector<16x128xf32> -> vector<16x128xf32>
    %72 = vector.broadcast %65 : vector<1x128xf32> to vector<16x128xf32>
    %73 = arith.addf %71, %72 : vector<16x128xf32>
    %74 = arith.truncf %73 : vector<16x128xf32> to vector<16x128xbf16>
    %cst_29 = arith.constant dense<0.000000e+00> : vector<40x128xf32>
    %75 = tpu.matmul %13, %74, %cst_29 {dimension_numbers = #tpu.dot_dimension_numbers<[0], [0], [1], [1], [0, 1, 1, 1], [], []>} : vector<16x40xbf16>, vector<16x128xbf16>, vector<40x128xf32> -> vector<40x128xf32>
    %76 = arith.addf %75, %26 : vector<40x128xf32>
    %cst_30 = arith.constant 0.000000e+00 : f32
    %77 = vector.broadcast %cst_30 : f32 to vector<40x128xf32>
    %78 = arith.maximumf %76, %77 : vector<40x128xf32>
    %79 = vector.broadcast %21 : vector<40x1xf32> to vector<40x128xf32>
    %80 = arith.mulf %78, %79 : vector<40x128xf32>
    %81 = arith.truncf %80 : vector<40x128xf32> to vector<40x128xbf16>
    %cst_31 = arith.constant dense<0.000000e+00> : vector<16x128xf32>
    %82 = tpu.matmul %14, %81, %cst_31 {dimension_numbers = #tpu.dot_dimension_numbers<[1], [0], [0], [1], [0, 0, 1, 1], [], []>} : vector<16x40xbf16>, vector<40x128xbf16>, vector<16x128xf32> -> vector<16x128xf32>
    %83 = vector.broadcast %19 : vector<16x1xf32> to vector<16x128xf32>
    %84 = arith.mulf %82, %83 : vector<16x128xf32>
    %85 = vector.broadcast %66 : vector<1x128xf32> to vector<16x128xf32>
    %86 = arith.addf %73, %85 : vector<16x128xf32>
    %cst_32 = arith.constant 0.000000e+00 : f32
    %87 = vector.broadcast %cst_32 : f32 to vector<16x128xf32>
    %88 = arith.maximumf %86, %87 : vector<16x128xf32>
    %89 = vector.broadcast %20 : vector<16x1xf32> to vector<16x128xf32>
    %90 = arith.mulf %88, %89 : vector<16x128xf32>
    %91 = arith.addf %84, %90 : vector<16x128xf32>
    %92 = arith.addf %62, %91 : vector<16x128xf32>
    %93 = vector.broadcast %67 : vector<1x128xf32> to vector<16x128xf32>
    %94 = arith.mulf %92, %93 : vector<16x128xf32>
    %95 = vector.broadcast %68 : vector<1x128xf32> to vector<16x128xf32>
    %96 = arith.addf %94, %95 : vector<16x128xf32>
    %cst_33 = arith.constant 0.000000e+00 : f32
    %97 = vector.broadcast %cst_33 : f32 to vector<16x128xf32>
    %98 = arith.maximumf %96, %97 : vector<16x128xf32>
    %c2 = arith.constant 2 : index
    %c0_34 = arith.constant 0 : index
    %c0_35 = arith.constant 0 : index
    %99 = vector.load %arg6[%c2, %c0_34, %c0_35] : memref<5x4x128xf32, #tpu.memory_space<vmem>>, vector<1x4x128xf32>
    %100 = vector.shape_cast %99 : vector<1x4x128xf32> to vector<4x128xf32>
    %101 = vector.extract_strided_slice %100 {offsets = [0, 0], sizes = [1, 128], strides = [1, 1]} : vector<4x128xf32> to vector<1x128xf32>
    %102 = vector.extract_strided_slice %100 {offsets = [1, 0], sizes = [1, 128], strides = [1, 1]} : vector<4x128xf32> to vector<1x128xf32>
    %103 = vector.extract_strided_slice %100 {offsets = [2, 0], sizes = [1, 128], strides = [1, 1]} : vector<4x128xf32> to vector<1x128xf32>
    %104 = vector.extract_strided_slice %100 {offsets = [3, 0], sizes = [1, 128], strides = [1, 1]} : vector<4x128xf32> to vector<1x128xf32>
    %c2_36 = arith.constant 2 : index
    %c0_37 = arith.constant 0 : index
    %c0_38 = arith.constant 0 : index
    %105 = vector.load %arg5[%c2_36, %c0_37, %c0_38] : memref<5x128x128xf32, #tpu.memory_space<vmem>>, vector<1x128x128xf32>
    %106 = vector.shape_cast %105 : vector<1x128x128xf32> to vector<128x128xf32>
    %cst_39 = arith.constant dense<0.000000e+00> : vector<16x128xf32>
    %107 = tpu.matmul %98, %106, %cst_39 {dimension_numbers = #tpu.dot_dimension_numbers<[1], [0], [0], [1], [0, 0, 1, 1], [], []>} : vector<16x128xf32>, vector<128x128xf32>, vector<16x128xf32> -> vector<16x128xf32>
    %108 = vector.broadcast %101 : vector<1x128xf32> to vector<16x128xf32>
    %109 = arith.addf %107, %108 : vector<16x128xf32>
    %110 = arith.truncf %109 : vector<16x128xf32> to vector<16x128xbf16>
    %cst_40 = arith.constant dense<0.000000e+00> : vector<40x128xf32>
    %111 = tpu.matmul %13, %110, %cst_40 {dimension_numbers = #tpu.dot_dimension_numbers<[0], [0], [1], [1], [0, 1, 1, 1], [], []>} : vector<16x40xbf16>, vector<16x128xbf16>, vector<40x128xf32> -> vector<40x128xf32>
    %112 = arith.addf %111, %26 : vector<40x128xf32>
    %cst_41 = arith.constant 0.000000e+00 : f32
    %113 = vector.broadcast %cst_41 : f32 to vector<40x128xf32>
    %114 = arith.maximumf %112, %113 : vector<40x128xf32>
    %115 = vector.broadcast %21 : vector<40x1xf32> to vector<40x128xf32>
    %116 = arith.mulf %114, %115 : vector<40x128xf32>
    %117 = arith.truncf %116 : vector<40x128xf32> to vector<40x128xbf16>
    %cst_42 = arith.constant dense<0.000000e+00> : vector<16x128xf32>
    %118 = tpu.matmul %14, %117, %cst_42 {dimension_numbers = #tpu.dot_dimension_numbers<[1], [0], [0], [1], [0, 0, 1, 1], [], []>} : vector<16x40xbf16>, vector<40x128xbf16>, vector<16x128xf32> -> vector<16x128xf32>
    %119 = vector.broadcast %19 : vector<16x1xf32> to vector<16x128xf32>
    %120 = arith.mulf %118, %119 : vector<16x128xf32>
    %121 = vector.broadcast %102 : vector<1x128xf32> to vector<16x128xf32>
    %122 = arith.addf %109, %121 : vector<16x128xf32>
    %cst_43 = arith.constant 0.000000e+00 : f32
    %123 = vector.broadcast %cst_43 : f32 to vector<16x128xf32>
    %124 = arith.maximumf %122, %123 : vector<16x128xf32>
    %125 = vector.broadcast %20 : vector<16x1xf32> to vector<16x128xf32>
    %126 = arith.mulf %124, %125 : vector<16x128xf32>
    %127 = arith.addf %120, %126 : vector<16x128xf32>
    %128 = arith.addf %98, %127 : vector<16x128xf32>
    %129 = vector.broadcast %103 : vector<1x128xf32> to vector<16x128xf32>
    %130 = arith.mulf %128, %129 : vector<16x128xf32>
    %131 = vector.broadcast %104 : vector<1x128xf32> to vector<16x128xf32>
    %132 = arith.addf %130, %131 : vector<16x128xf32>
    %cst_44 = arith.constant 0.000000e+00 : f32
    %133 = vector.broadcast %cst_44 : f32 to vector<16x128xf32>
    %134 = arith.maximumf %132, %133 : vector<16x128xf32>
    %c3 = arith.constant 3 : index
    %c0_45 = arith.constant 0 : index
    %c0_46 = arith.constant 0 : index
    %135 = vector.load %arg6[%c3, %c0_45, %c0_46] : memref<5x4x128xf32, #tpu.memory_space<vmem>>, vector<1x4x128xf32>
    %136 = vector.shape_cast %135 : vector<1x4x128xf32> to vector<4x128xf32>
    %137 = vector.extract_strided_slice %136 {offsets = [0, 0], sizes = [1, 128], strides = [1, 1]} : vector<4x128xf32> to vector<1x128xf32>
    %138 = vector.extract_strided_slice %136 {offsets = [1, 0], sizes = [1, 128], strides = [1, 1]} : vector<4x128xf32> to vector<1x128xf32>
    %139 = vector.extract_strided_slice %136 {offsets = [2, 0], sizes = [1, 128], strides = [1, 1]} : vector<4x128xf32> to vector<1x128xf32>
    %140 = vector.extract_strided_slice %136 {offsets = [3, 0], sizes = [1, 128], strides = [1, 1]} : vector<4x128xf32> to vector<1x128xf32>
    %c3_47 = arith.constant 3 : index
    %c0_48 = arith.constant 0 : index
    %c0_49 = arith.constant 0 : index
    %141 = vector.load %arg5[%c3_47, %c0_48, %c0_49] : memref<5x128x128xf32, #tpu.memory_space<vmem>>, vector<1x128x128xf32>
    %142 = vector.shape_cast %141 : vector<1x128x128xf32> to vector<128x128xf32>
    %cst_50 = arith.constant dense<0.000000e+00> : vector<16x128xf32>
    %143 = tpu.matmul %134, %142, %cst_50 {dimension_numbers = #tpu.dot_dimension_numbers<[1], [0], [0], [1], [0, 0, 1, 1], [], []>} : vector<16x128xf32>, vector<128x128xf32>, vector<16x128xf32> -> vector<16x128xf32>
    %144 = vector.broadcast %137 : vector<1x128xf32> to vector<16x128xf32>
    %145 = arith.addf %143, %144 : vector<16x128xf32>
    %146 = arith.truncf %145 : vector<16x128xf32> to vector<16x128xbf16>
    %cst_51 = arith.constant dense<0.000000e+00> : vector<40x128xf32>
    %147 = tpu.matmul %13, %146, %cst_51 {dimension_numbers = #tpu.dot_dimension_numbers<[0], [0], [1], [1], [0, 1, 1, 1], [], []>} : vector<16x40xbf16>, vector<16x128xbf16>, vector<40x128xf32> -> vector<40x128xf32>
    %148 = arith.addf %147, %26 : vector<40x128xf32>
    %cst_52 = arith.constant 0.000000e+00 : f32
    %149 = vector.broadcast %cst_52 : f32 to vector<40x128xf32>
    %150 = arith.maximumf %148, %149 : vector<40x128xf32>
    %151 = vector.broadcast %21 : vector<40x1xf32> to vector<40x128xf32>
    %152 = arith.mulf %150, %151 : vector<40x128xf32>
    %153 = arith.truncf %152 : vector<40x128xf32> to vector<40x128xbf16>
    %cst_53 = arith.constant dense<0.000000e+00> : vector<16x128xf32>
    %154 = tpu.matmul %14, %153, %cst_53 {dimension_numbers = #tpu.dot_dimension_numbers<[1], [0], [0], [1], [0, 0, 1, 1], [], []>} : vector<16x40xbf16>, vector<40x128xbf16>, vector<16x128xf32> -> vector<16x128xf32>
    %155 = vector.broadcast %19 : vector<16x1xf32> to vector<16x128xf32>
    %156 = arith.mulf %154, %155 : vector<16x128xf32>
    %157 = vector.broadcast %138 : vector<1x128xf32> to vector<16x128xf32>
    %158 = arith.addf %145, %157 : vector<16x128xf32>
    %cst_54 = arith.constant 0.000000e+00 : f32
    %159 = vector.broadcast %cst_54 : f32 to vector<16x128xf32>
    %160 = arith.maximumf %158, %159 : vector<16x128xf32>
    %161 = vector.broadcast %20 : vector<16x1xf32> to vector<16x128xf32>
    %162 = arith.mulf %160, %161 : vector<16x128xf32>
    %163 = arith.addf %156, %162 : vector<16x128xf32>
    %164 = arith.addf %134, %163 : vector<16x128xf32>
    %165 = vector.broadcast %139 : vector<1x128xf32> to vector<16x128xf32>
    %166 = arith.mulf %164, %165 : vector<16x128xf32>
    %167 = vector.broadcast %140 : vector<1x128xf32> to vector<16x128xf32>
    %168 = arith.addf %166, %167 : vector<16x128xf32>
    %cst_55 = arith.constant 0.000000e+00 : f32
    %169 = vector.broadcast %cst_55 : f32 to vector<16x128xf32>
    %170 = arith.maximumf %168, %169 : vector<16x128xf32>
    %c4 = arith.constant 4 : index
    %c0_56 = arith.constant 0 : index
    %c0_57 = arith.constant 0 : index
    %171 = vector.load %arg6[%c4, %c0_56, %c0_57] : memref<5x4x128xf32, #tpu.memory_space<vmem>>, vector<1x4x128xf32>
    %172 = vector.shape_cast %171 : vector<1x4x128xf32> to vector<4x128xf32>
    %173 = vector.extract_strided_slice %172 {offsets = [0, 0], sizes = [1, 128], strides = [1, 1]} : vector<4x128xf32> to vector<1x128xf32>
    %174 = vector.extract_strided_slice %172 {offsets = [1, 0], sizes = [1, 128], strides = [1, 1]} : vector<4x128xf32> to vector<1x128xf32>
    %175 = vector.extract_strided_slice %172 {offsets = [2, 0], sizes = [1, 128], strides = [1, 1]} : vector<4x128xf32> to vector<1x128xf32>
    %176 = vector.extract_strided_slice %172 {offsets = [3, 0], sizes = [1, 128], strides = [1, 1]} : vector<4x128xf32> to vector<1x128xf32>
    %c4_58 = arith.constant 4 : index
    %c0_59 = arith.constant 0 : index
    %c0_60 = arith.constant 0 : index
    %177 = vector.load %arg5[%c4_58, %c0_59, %c0_60] : memref<5x128x128xf32, #tpu.memory_space<vmem>>, vector<1x128x128xf32>
    %178 = vector.shape_cast %177 : vector<1x128x128xf32> to vector<128x128xf32>
    %cst_61 = arith.constant dense<0.000000e+00> : vector<16x128xf32>
    %179 = tpu.matmul %170, %178, %cst_61 {dimension_numbers = #tpu.dot_dimension_numbers<[1], [0], [0], [1], [0, 0, 1, 1], [], []>} : vector<16x128xf32>, vector<128x128xf32>, vector<16x128xf32> -> vector<16x128xf32>
    %180 = vector.broadcast %173 : vector<1x128xf32> to vector<16x128xf32>
    %181 = arith.addf %179, %180 : vector<16x128xf32>
    %182 = arith.truncf %181 : vector<16x128xf32> to vector<16x128xbf16>
    %cst_62 = arith.constant dense<0.000000e+00> : vector<40x128xf32>
    %183 = tpu.matmul %13, %182, %cst_62 {dimension_numbers = #tpu.dot_dimension_numbers<[0], [0], [1], [1], [0, 1, 1, 1], [], []>} : vector<16x40xbf16>, vector<16x128xbf16>, vector<40x128xf32> -> vector<40x128xf32>
    %184 = arith.addf %183, %26 : vector<40x128xf32>
    %cst_63 = arith.constant 0.000000e+00 : f32
    %185 = vector.broadcast %cst_63 : f32 to vector<40x128xf32>
    %186 = arith.maximumf %184, %185 : vector<40x128xf32>
    %187 = vector.broadcast %21 : vector<40x1xf32> to vector<40x128xf32>
    %188 = arith.mulf %186, %187 : vector<40x128xf32>
    %189 = arith.truncf %188 : vector<40x128xf32> to vector<40x128xbf16>
    %cst_64 = arith.constant dense<0.000000e+00> : vector<16x128xf32>
    %190 = tpu.matmul %14, %189, %cst_64 {dimension_numbers = #tpu.dot_dimension_numbers<[1], [0], [0], [1], [0, 0, 1, 1], [], []>} : vector<16x40xbf16>, vector<40x128xbf16>, vector<16x128xf32> -> vector<16x128xf32>
    %191 = vector.broadcast %19 : vector<16x1xf32> to vector<16x128xf32>
    %192 = arith.mulf %190, %191 : vector<16x128xf32>
    %193 = vector.broadcast %174 : vector<1x128xf32> to vector<16x128xf32>
    %194 = arith.addf %181, %193 : vector<16x128xf32>
    %cst_65 = arith.constant 0.000000e+00 : f32
    %195 = vector.broadcast %cst_65 : f32 to vector<16x128xf32>
    %196 = arith.maximumf %194, %195 : vector<16x128xf32>
    %197 = vector.broadcast %20 : vector<16x1xf32> to vector<16x128xf32>
    %198 = arith.mulf %196, %197 : vector<16x128xf32>
    %199 = arith.addf %192, %198 : vector<16x128xf32>
    %200 = arith.addf %170, %199 : vector<16x128xf32>
    %201 = vector.broadcast %175 : vector<1x128xf32> to vector<16x128xf32>
    %202 = arith.mulf %200, %201 : vector<16x128xf32>
    %203 = vector.broadcast %176 : vector<1x128xf32> to vector<16x128xf32>
    %204 = arith.addf %202, %203 : vector<16x128xf32>
    %205 = tpu.iota {dimensions = array<i32: 0>} : vector<2x16xi32>
    %206 = vector.broadcast %3 : vector<1x16xi32> to vector<2x16xi32>
    %207 = arith.cmpi eq, %206, %205 : vector<2x16xi32>
    %208 = arith.extui %207 : vector<2x16xi1> to vector<2x16xi32>
    %209 = arith.sitofp %208 : vector<2x16xi32> to vector<2x16xf32>
    %cst_66 = arith.constant dense<0.000000e+00> : vector<2xf32>
    %210 = vector.multi_reduction <add>, %209, %cst_66 [1] : vector<2x16xf32> to vector<2xf32>
    %211 = vector.shape_cast %210 : vector<2xf32> to vector<2x1xf32>
    %cst_67 = arith.constant 1.000000e+00 : f32
    %212 = vector.broadcast %cst_67 : f32 to vector<2x1xf32>
    %213 = arith.maximumf %211, %212 : vector<2x1xf32>
    %214 = arith.truncf %209 : vector<2x16xf32> to vector<2x16xbf16>
    %215 = arith.truncf %204 : vector<16x128xf32> to vector<16x128xbf16>
    %cst_68 = arith.constant dense<0.000000e+00> : vector<2x128xf32>
    %216 = tpu.matmul %214, %215, %cst_68 {dimension_numbers = #tpu.dot_dimension_numbers<[1], [0], [0], [1], [0, 0, 1, 1], [], []>} : vector<2x16xbf16>, vector<16x128xbf16>, vector<2x128xf32> -> vector<2x128xf32>
    %217 = tpu.reciprocal %213 {approx = true} : vector<2x1xf32> -> vector<2x1xf32>
    %218 = vector.broadcast %217 : vector<2x1xf32> to vector<2x128xf32>
    %219 = arith.mulf %216, %218 : vector<2x128xf32>
    %c0_69 = arith.constant 0 : index
    %c0_70 = arith.constant 0 : index
    %220 = vector.load %arg7[%c0_69, %c0_70] : memref<192x64xf32, #tpu.memory_space<vmem>>, vector<192x64xf32>
    %221 = vector.extract_strided_slice %220 {offsets = [0, 0], sizes = [128, 64], strides = [1, 1]} : vector<192x64xf32> to vector<128x64xf32>
    %222 = vector.extract_strided_slice %220 {offsets = [128, 0], sizes = [64, 64], strides = [1, 1]} : vector<192x64xf32> to vector<64x64xf32>
    %c0_71 = arith.constant 0 : index
    %c0_72 = arith.constant 0 : index
    %223 = vector.load %arg8[%c0_71, %c0_72] : memref<4x64xf32, #tpu.memory_space<vmem>>, vector<4x64xf32>
    %224 = vector.extract_strided_slice %223 {offsets = [0, 0], sizes = [1, 64], strides = [1, 1]} : vector<4x64xf32> to vector<1x64xf32>
    %225 = vector.extract_strided_slice %223 {offsets = [1, 0], sizes = [1, 64], strides = [1, 1]} : vector<4x64xf32> to vector<1x64xf32>
    %226 = vector.extract_strided_slice %223 {offsets = [2, 0], sizes = [1, 64], strides = [1, 1]} : vector<4x64xf32> to vector<1x64xf32>
    %227 = vector.extract_strided_slice %223 {offsets = [3, 0], sizes = [1, 1], strides = [1, 1]} : vector<4x64xf32> to vector<1x1xf32>
    %cst_73 = arith.constant dense<0.000000e+00> : vector<2x64xf32>
    %228 = tpu.matmul %219, %221, %cst_73 {dimension_numbers = #tpu.dot_dimension_numbers<[1], [0], [0], [1], [0, 0, 1, 1], [], []>} : vector<2x128xf32>, vector<128x64xf32>, vector<2x64xf32> -> vector<2x64xf32>
    %229 = vector.broadcast %224 : vector<1x64xf32> to vector<2x64xf32>
    %230 = arith.addf %228, %229 : vector<2x64xf32>
    %cst_74 = arith.constant 0.000000e+00 : f32
    %231 = vector.broadcast %cst_74 : f32 to vector<2x64xf32>
    %232 = arith.maximumf %230, %231 : vector<2x64xf32>
    %cst_75 = arith.constant dense<0.000000e+00> : vector<2x64xf32>
    %233 = tpu.matmul %232, %222, %cst_75 {dimension_numbers = #tpu.dot_dimension_numbers<[1], [0], [0], [1], [0, 0, 1, 1], [], []>} : vector<2x64xf32>, vector<64x64xf32>, vector<2x64xf32> -> vector<2x64xf32>
    %234 = vector.broadcast %225 : vector<1x64xf32> to vector<2x64xf32>
    %235 = arith.addf %233, %234 : vector<2x64xf32>
    %cst_76 = arith.constant 0.000000e+00 : f32
    %236 = vector.broadcast %cst_76 : f32 to vector<2x64xf32>
    %237 = arith.maximumf %235, %236 : vector<2x64xf32>
    %238 = vector.broadcast %226 : vector<1x64xf32> to vector<2x64xf32>
    %239 = arith.mulf %237, %238 : vector<2x64xf32>
    %cst_77 = arith.constant dense<0.000000e+00> : vector<2xf32>
    %240 = vector.multi_reduction <add>, %239, %cst_77 [1] : vector<2x64xf32> to vector<2xf32>
    %241 = vector.shape_cast %240 : vector<2xf32> to vector<2x1xf32>
    %242 = vector.broadcast %227 : vector<1x1xf32> to vector<2x1xf32>
    %243 = arith.addf %241, %242 : vector<2x1xf32>
    %c0_78 = arith.constant 0 : index
    %c0_79 = arith.constant 0 : index
    %244 = vector.load %arg9[%c0_78, %c0_79] : memref<2x1xf32, #tpu.memory_space<vmem>>, vector<2x1xf32>
    tpu.vector_store %arg9[%c0_78, %c0_79], %243 {strides = array<i32>} : memref<2x1xf32, #tpu.memory_space<vmem>>, vector<2x1xf32>,
    return
  }
  func.func @transform_0(%arg0: i32) -> (i32, i32) {
    %c0_i32 = arith.constant 0 : i32
    %c0_i32_0 = arith.constant 0 : i32
    %c0_i32_1 = arith.constant 0 : i32
    return %c0_i32, %c0_i32_0 : i32, i32
  }
  func.func @transform_1(%arg0: i32) -> (i32, i32) {
    %c0_i32 = arith.constant 0 : i32
    %c0_i32_0 = arith.constant 0 : i32
    %c0_i32_1 = arith.constant 0 : i32
    return %c0_i32, %c0_i32_0 : i32, i32
  }
  func.func @transform_2(%arg0: i32) -> (i32, i32) {
    %c0_i32 = arith.constant 0 : i32
    %c0_i32_0 = arith.constant 0 : i32
    %c0_i32_1 = arith.constant 0 : i32
    return %c0_i32, %c0_i32_0 : i32, i32
  }
  func.func @transform_3(%arg0: i32) -> (i32, i32) {
    %c0_i32 = arith.constant 0 : i32
    %c0_i32_0 = arith.constant 0 : i32
    %c0_i32_1 = arith.constant 0 : i32
    return %c0_i32, %c0_i32_0 : i32, i32
  }
  func.func @transform_4(%arg0: i32) -> (i32, i32, i32) {
    %c0_i32 = arith.constant 0 : i32
    %c0_i32_0 = arith.constant 0 : i32
    %c0_i32_1 = arith.constant 0 : i32
    %c0_i32_2 = arith.constant 0 : i32
    return %c0_i32, %c0_i32_0, %c0_i32_1 : i32, i32, i32
  }
  func.func @transform_5(%arg0: i32) -> (i32, i32, i32) {
    %c0_i32 = arith.constant 0 : i32
    %c0_i32_0 = arith.constant 0 : i32
    %c0_i32_1 = arith.constant 0 : i32
    %c0_i32_2 = arith.constant 0 : i32
    return %c0_i32, %c0_i32_0, %c0_i32_1 : i32, i32, i32
  }
  func.func @transform_6(%arg0: i32) -> (i32, i32) {
    %c0_i32 = arith.constant 0 : i32
    %c0_i32_0 = arith.constant 0 : i32
    %c0_i32_1 = arith.constant 0 : i32
    return %c0_i32, %c0_i32_0 : i32, i32
  }
  func.func @transform_7(%arg0: i32) -> (i32, i32) {
    %c0_i32 = arith.constant 0 : i32
    %c0_i32_0 = arith.constant 0 : i32
    %c0_i32_1 = arith.constant 0 : i32
    return %c0_i32, %c0_i32_0 : i32, i32
  }
  func.func @transform_8(%arg0: i32) -> (i32, i32) {
    %c0_i32 = arith.constant 0 : i32
    %c0_i32_0 = arith.constant 0 : i32
    %c0_i32_1 = arith.constant 0 : i32
    return %c0_i32, %c0_i32_0 : i32, i32
  }
}

</mosaic_0001>

<llo_original>
// kernel: gcn_forward.1
$region0: #{gcn_forward.1}
  #allocation0 [shape = 'u32[]', space=smem, size = 0x4, offset = 0x4, fixed_abs, tag = 'smem constant byte address 0x4 - core index']
  #allocation1 [shape = 'u32[144,128]{1,0:T(1,128)}', space=vmem, size = 0x12000, scoped, tag = 'internal scratch']
  %s0 = inlined_call_operand.vmem [shape: s32[3,40], index: 0, kind: input, shape index: {}]
  %s1 = inlined_call_operand.vmem [shape: f32[16,52], index: 1, kind: input, shape index: {}]
  %s2 = inlined_call_operand.vmem [shape: f32[40,52], index: 2, kind: input, shape index: {}]
  %s3 = inlined_call_operand.vmem [shape: f32[52,128], index: 3, kind: input, shape index: {}]
  %s4 = inlined_call_operand.hbm [shape: f32[5,128,128], index: 4, kind: input, shape index: {}]
  %s5 = inlined_call_operand.vmem [shape: f32[5,4,128], index: 5, kind: input, shape index: {}]
  %s6 = inlined_call_operand.vmem [shape: f32[192,64], index: 6, kind: input, shape index: {}]
  %s7 = inlined_call_operand.vmem [shape: f32[4,64], index: 7, kind: input, shape index: {}]
  %s8 = inlined_call_operand.vmem [shape: f32[2,1], index: 8, kind: output, shape index: {}]
  %s9 = sld [smem:[#allocation0]]
  $region46: #{gcn_forward.1} parent=0
    _
  %s11 = ssub.s32 1, %s9
  %s12 = scalar_select 0, %s11, %s9
  $region1: #{gcn_forward.1} parent=0
    #allocation2 [shape = 'u8[327680]{0}', space=vmem, size = 0x50000, scoped, tag = 'input window, operand 4, single buffered']
    #allocation3 [shape = 's32[1]{0}', space=sflag, size = 0x4, scoped, tag = 'scoped memory for gcn_forward.1']
    %13 = vsyncpa [#allocation3], 0
    // Predicated region
    $region2: #{gcn_forward.1} parent=1 // pred_check
      _
    $region3: #{gcn_forward.1} parent=1 // pred_check_branch
      %15 = sbr.rel (0) target = $region5
    $region4: #{gcn_forward.1} parent=1 // pred_region
      _
    $region5: #{gcn_forward.1} parent=1 // pred_fallthru
      _
    // Predicated region
    $region6: #{gcn_forward.1} parent=1 // pred_check
      _
    $region7: #{gcn_forward.1} parent=1 // pred_check_branch
      %17 = sbr.rel (0) target = $region9
    $region8: #{gcn_forward.1} parent=1 // pred_region
      _
    $region9: #{gcn_forward.1} parent=1 // pred_fallthru
      _
    // Predicated region
    $region10: #{gcn_forward.1} parent=1 // pred_check
      _
    $region11: #{gcn_forward.1} parent=1 // pred_check_branch
      %19 = sbr.rel (0) target = $region13
    $region12: #{gcn_forward.1} parent=1 // pred_region
      _
    $region13: #{gcn_forward.1} parent=1 // pred_fallthru
      _
    // Predicated region
    $region14: #{gcn_forward.1} parent=1 // pred_check
      _
    $region15: #{gcn_forward.1} parent=1 // pred_check_branch
      %21 = sbr.rel (0) target = $region17
    $region16: #{gcn_forward.1} parent=1 // pred_region
      _
    $region17: #{gcn_forward.1} parent=1 // pred_fallthru
      _
    // Predicated region
    $region18: #{gcn_forward.1} parent=1 // pred_check
      _
    $region19: #{gcn_forward.1} parent=1 // pred_check_branch
      %23 = sbr.rel (0) target = $region21
    $region20: #{gcn_forward.1} parent=1 // pred_region
      %s25 = ssub.s32 10240, 10240
      %26 = vsyncadd [#allocation3], %s25
      %s27 = sshll.u32 [#allocation2], 4
      %s28 = int_to_ptr.vmem [resolvable:$true] %s27
      %33 = dma.hbm_to_vmem [thread:$0]  %s4, 10240, %s28, [#allocation3], 128, 128, 8
    $region21: #{gcn_forward.1} parent=1 // pred_fallthru
      _
    // Predicated region
    $region22: #{gcn_forward.1} parent=1 // pred_check
      _
    $region23: #{gcn_forward.1} parent=1 // pred_check_branch
      %35 = sbr.rel (0) target = $region25
    $region24: #{gcn_forward.1} parent=1 // pred_region
      _
    $region25: #{gcn_forward.1} parent=1 // pred_fallthru
      _
    // Predicated region
    $region26: #{gcn_forward.1} parent=1 // pred_check
      _
    $region27: #{gcn_forward.1} parent=1 // pred_check_branch
      %37 = sbr.rel (0) target = $region29
    $region28: #{gcn_forward.1} parent=1 // pred_region
      _
    $region29: #{gcn_forward.1} parent=1 // pred_fallthru
      _
    // Predicated region
    $region30: #{gcn_forward.1} parent=1 // pred_check
      _
    $region31: #{gcn_forward.1} parent=1 // pred_check_branch
      %39 = sbr.rel (0) target = $region33
    $region32: #{gcn_forward.1} parent=1 // pred_region
      _
    $region33: #{gcn_forward.1} parent=1 // pred_fallthru
      _
    // Predicated region
    $region34: #{gcn_forward.1} parent=1 // pred_check
      _
    $region35: #{gcn_forward.1} parent=1 // pred_check_branch
      %41 = sbr.rel (0) target = $region37
    $region36: #{gcn_forward.1} parent=1 // pred_region
      %42 = dma.done [#allocation3], 10240
    $region37: #{gcn_forward.1} parent=1 // pred_fallthru
      _
    %v44 = vld [vmem:[%s0] sm:$0x7]
    %v45 = vlaneseq
    %v46 = vshrl.u32 %v45, 7
    %v47 = vadd.s32 %v46, 8
    %v48 = vlaneseq
    %v49 = vshrl.u32 %v48, 7
    %v50 = vsub.s32 0, %v49
    %v51 = vrot.slane %v44, %v50
    %vm52 = vcmp.eq.s32.totalorder %v51, %v46
    %vm53 = vcmp.eq.s32.totalorder %v51, %v47
    %v54 = vsel %vm52, 1, 0
    %v55 = vsel %vm53, 1, 0
    %v56 = vcvt.s32.f32 %v54
    %v57 = vcvt.s32.f32 %v55
    %v58 = vlaneseq
    %v59 = vshrl.u32 %v58, 7
    %v60 = vsub.s32 1, %v59
    %v61 = vrot.slane %v44, %v60
    %vm62 = vcmp.eq.s32.totalorder %v61, %v46
    %vm63 = vcmp.eq.s32.totalorder %v61, %v47
    %v64 = vpack.c.bf16 %v57, %v56
    %v65 = vsel %vm62, 1, 0
    %v66 = vsel %vm63, 1, 0
    %v67 = vcvt.s32.f32 %v65
    %v68 = vcvt.s32.f32 %v66
    %v69 = vpack.c.bf16 %v68, %v67
    %vm70 = vcmask 326656
    %v71 = vsel %vm70, %v56, 0.0
    %72 = vadd.xlane.f32.xlu0 %v71
    %v73 = vpop.xlane.xlu0 %72
    %v74 = vsel %vm70, %v57, 0.0
    %75 = vadd.xlane.f32.xlu0 %v74
    %v76 = vpop.xlane.xlu0 %75
    %v77 = vadd.f32 %v73, 1.0
    %v78 = vadd.f32 %v76, 1.0
    %v79 = vrsqrt.pop %v77
    %v80 = vrsqrt.pop %v78
    %v81 = vrcp.pop %v77
    %v82 = vrcp.pop %v78
    %83 = vxpose.xlu0.b32.start [1/16] %v56, 128
    %84 = vxpose.xlu0.b32.cont [2/16] %v57, 128
    %85 = vxpose.xlu0.b32.cont [3/16] 0.0, 128
    %86 = vxpose.xlu0.b32.cont [4/16] 0.0, 128
    %87 = vxpose.xlu0.b32.cont [5/16] 0.0, 128
    %88 = vxpose.xlu0.b32.cont [6/16] 0.0, 128
    %89 = vxpose.xlu0.b32.cont [7/16] 0.0, 128
    %90 = vxpose.xlu0.b32.cont [8/16] 0.0, 128
    %91 = vxpose.xlu0.b32.cont [9/16] 0.0, 128
    %92 = vxpose.xlu0.b32.cont [10/16] 0.0, 128
    %93 = vxpose.xlu0.b32.cont [11/16] 0.0, 128
    %94 = vxpose.xlu0.b32.cont [12/16] 0.0, 128
    %95 = vxpose.xlu0.b32.cont [13/16] 0.0, 128
    %96 = vxpose.xlu0.b32.cont [14/16] 0.0, 128
    %97 = vxpose.xlu0.b32.cont [15/16] 0.0, 128
    %98 = vxpose.xlu0.b32.end [16/16] 0.0, 128
    %v99 = vpop.trf.xlu0
    %v100 = vpop.trf.xlu0
    %v101 = vpop.trf.xlu0
    %v102 = vpop.trf.xlu0
    %v103 = vpop.trf.xlu0
    %v104 = vpop.trf.xlu0
    %v105 = vpop.trf.xlu0
    %v106 = vpop.trf.xlu0
    %v107 = vpop.trf.xlu0
    %v108 = vpop.trf.xlu0
    %v109 = vpop.trf.xlu0
    %v110 = vpop.trf.xlu0
    %v111 = vpop.trf.xlu0
    %v112 = vpop.trf.xlu0
    %v113 = vpop.trf.xlu0
    %v114 = vpop.trf.xlu0
    %vm115 = vcmask 130048
    %v117 = vsel %vm115, %v99, 0
    %v120 = vsel %vm115, %v100, 0
    %v123 = vsel %vm115, %v101, 0
    %v126 = vsel %vm115, %v102, 0
    %v129 = vsel %vm115, %v103, 0
    %131 = vmatprep.subr.mxu0 0.0
    %132 = vmatpush1.msra.mxu0 %v79
    %133 = vmatprep.subr.mxu0 0.0
    %134 = vmatpush1.msra.mxu0 %v80
    %135 = vmatprep.subr.mxu0 0.0
    %136 = vmatpush1.msra.mxu0 0.0
    %137 = vmatprep.subr.mxu0 0.0
    %138 = vmatpush1.msra.mxu0 0.0
    %139 = vmatprep.subr.mxu0 0.0
    %140 = vmatpush1.msra.mxu0 0.0
    %141 = vmatprep.subr.mxu0 0.0
    %142 = vmatpush1.msra.mxu0 0.0
    %143 = vmatprep.subr.mxu0 0.0
    %144 = vmatpush1.msra.mxu0 0.0
    %145 = vmatprep.subr.mxu0 0.0
    %146 = vmatpush1.msra.mxu0 0.0
    %147 = vmatprep.subr.mxu0 0.0
    %148 = vmatpush1.msra.mxu0 0.0
    %149 = vmatprep.subr.mxu0 0.0
    %150 = vmatpush1.msra.mxu0 0.0
    %151 = vmatprep.subr.mxu0 0.0
    %152 = vmatpush1.msra.mxu0 0.0
    %153 = vmatprep.subr.mxu0 0.0
    %154 = vmatpush1.msra.mxu0 0.0
    %155 = vmatprep.subr.mxu0 0.0
    %156 = vmatpush1.msra.mxu0 0.0
    %157 = vmatprep.subr.mxu0 0.0
    %158 = vmatpush1.msra.mxu0 0.0
    %159 = vmatprep.subr.mxu0 0.0
    %160 = vmatpush1.msra.mxu0 0.0
    %161 = vmatprep.subr.mxu0 0.0
    %162 = vmatpush1.msra.mxu0 0.0
    %163 = vmatprep.subr.mxu0 0.0
    %164 = vmatpush1.msra.mxu0 0.0
    %165 = vmatprep.subr.mxu0 0.0
    %166 = vmatpush1.msra.mxu0 0.0
    %167 = vmatprep.subr.mxu0 0.0
    %168 = vmatpush1.msra.mxu0 0.0
    %169 = vmatprep.subr.mxu0 0.0
    %170 = vmatpush1.msra.mxu0 0.0
    %171 = vmatprep.subr.mxu0 0.0
    %172 = vmatpush1.msra.mxu0 0.0
    %173 = vmatprep.subr.mxu0 0.0
    %174 = vmatpush1.msra.mxu0 0.0
    %175 = vmatprep.subr.mxu0 0.0
    %176 = vmatpush1.msra.mxu0 0.0
    %177 = vmatprep.subr.mxu0 0.0
    %178 = vmatpush1.msra.mxu0 0.0
    %179 = vmatprep.subr.mxu0 0.0
    %180 = vmatpush1.msra.mxu0 0.0
    %181 = vmatprep.subr.mxu0 0.0
    %182 = vmatpush1.msra.mxu0 0.0
    %183 = vmatprep.subr.mxu0 0.0
    %184 = vmatpush1.msra.mxu0 0.0
    %185 = vmatprep.subr.mxu0 0.0
    %186 = vmatpush1.msra.mxu0 0.0
    %187 = vmatprep.subr.mxu0 0.0
    %188 = vmatpush1.msra.mxu0 0.0
    %189 = vmatprep.subr.mxu0 0.0
    %190 = vmatpush1.msra.mxu0 0.0
    %191 = vmatprep.subr.mxu0 0.0
    %192 = vmatpush1.msra.mxu0 0.0
    %193 = vmatprep.subr.mxu0 0.0
    %194 = vmatpush1.msra.mxu0 0.0
    %195 = vmatprep.mubr.f32.mxu0 0.0
    %196 = vmatmul.mubr.f32.gmra.mrb[0].mxu0 %v117
    %v197 = vpop.f32.mrb[0].mxu0
    %v198 = vadd.f32 0.0, %v197
    %v199 = vpop.f32.mrb[0].mxu0
    %200 = vmatprep.mubr.f32.mxu0 0.0
    %201 = vmatmul.mubr.f32.gmra.mrb[0].mxu0 %v120
    %v202 = vpop.f32.mrb[0].mxu0
    %v203 = vadd.f32 0.0, %v202
    %v204 = vpop.f32.mrb[0].mxu0
    %205 = vmatprep.mubr.f32.mxu0 0.0
    %206 = vmatmul.mubr.f32.gmra.mrb[0].mxu0 %v123
    %v207 = vpop.f32.mrb[0].mxu0
    %v208 = vadd.f32 0.0, %v207
    %v209 = vpop.f32.mrb[0].mxu0
    %210 = vmatprep.mubr.f32.mxu0 0.0
    %211 = vmatmul.mubr.f32.gmra.mrb[0].mxu0 %v126
    %v212 = vpop.f32.mrb[0].mxu0
    %v213 = vadd.f32 0.0, %v212
    %v214 = vpop.f32.mrb[0].mxu0
    %215 = vmatprep.mubr.f32.mxu0 0.0
    %216 = vmatmul.mubr.f32.gmra.mrb[0].mxu0 %v129
    %v217 = vpop.f32.mrb[0].mxu0
    %v218 = vadd.f32 0.0, %v217
    %v219 = vpop.f32.mrb[0].mxu0
    %220 = vdwg.mxu0
    %v221 = vld [vmem:[%s3] sm:$0xff]
    %v222 = vld [vmem:[%s3 + $0x8] sm:$0xff]
    %v223 = vld [vmem:[%s3 + $0x10] sm:$0xff]
    %v224 = vld [vmem:[%s3 + $0x18] sm:$0xff]
    %v225 = vld [vmem:[%s3 + $0x20] sm:$0xff]
    %v226 = vld [vmem:[%s3 + $0x28] sm:$0xff]
    %v227 = vld [vmem:[%s3 + $0x30] sm:$0xf]
    %v228 = vld [vmem:[%s1] sm:$0xff]
    %v229 = vld [vmem:[%s1 + $0x8] sm:$0xff]
    %vm230 = vcmask 424960
    %v232 = vsel %vm230, %v228, 0
    %v235 = vsel %vm230, %v229, 0
    %vm237 = vcmask 1043456
    %v239 = vsel %vm237, %v227, 0
    %241 = vmatprep.subr.mxu0 0.0
    %242 = vmatpush1.msra.mxu0 %v221
    %243 = vmatprep.subr.mxu0 0.0
    %244 = vmatpush1.msra.mxu0 %v222
    %245 = vmatprep.subr.mxu0 0.0
    %246 = vmatpush1.msra.mxu0 %v223
    %247 = vmatprep.subr.mxu0 0.0
    %248 = vmatpush1.msra.mxu0 %v224
    %249 = vmatprep.subr.mxu0 0.0
    %250 = vmatpush1.msra.mxu0 %v225
    %251 = vmatprep.subr.mxu0 0.0
    %252 = vmatpush1.msra.mxu0 %v226
    %253 = vmatprep.subr.mxu0 0.0
    %254 = vmatpush1.msra.mxu0 %v239
    %255 = vmatprep.subr.mxu0 0.0
    %256 = vmatpush1.msra.mxu0 0.0
    %257 = vmatprep.subr.mxu0 0.0
    %258 = vmatpush1.msra.mxu0 0.0
    %259 = vmatprep.subr.mxu0 0.0
    %260 = vmatpush1.msra.mxu0 0.0
    %261 = vmatprep.subr.mxu0 0.0
    %262 = vmatpush1.msra.mxu0 0.0
    %263 = vmatprep.subr.mxu0 0.0
    %264 = vmatpush1.msra.mxu0 0.0
    %265 = vmatprep.subr.mxu0 0.0
    %266 = vmatpush1.msra.mxu0 0.0
    %267 = vmatprep.subr.mxu0 0.0
    %268 = vmatpush1.msra.mxu0 0.0
    %269 = vmatprep.subr.mxu0 0.0
    %270 = vmatpush1.msra.mxu0 0.0
    %271 = vmatprep.subr.mxu0 0.0
    %272 = vmatpush1.msra.mxu0 0.0
    %273 = vmatprep.subr.mxu0 0.0
    %274 = vmatpush1.msra.mxu0 0.0
    %275 = vmatprep.subr.mxu0 0.0
    %276 = vmatpush1.msra.mxu0 0.0
    %277 = vmatprep.subr.mxu0 0.0
    %278 = vmatpush1.msra.mxu0 0.0
    %279 = vmatprep.subr.mxu0 0.0
    %280 = vmatpush1.msra.mxu0 0.0
    %281 = vmatprep.subr.mxu0 0.0
    %282 = vmatpush1.msra.mxu0 0.0
    %283 = vmatprep.subr.mxu0 0.0
    %284 = vmatpush1.msra.mxu0 0.0
    %285 = vmatprep.subr.mxu0 0.0
    %286 = vmatpush1.msra.mxu0 0.0
    %287 = vmatprep.subr.mxu0 0.0
    %288 = vmatpush1.msra.mxu0 0.0
    %289 = vmatprep.subr.mxu0 0.0
    %290 = vmatpush1.msra.mxu0 0.0
    %291 = vmatprep.subr.mxu0 0.0
    %292 = vmatpush1.msra.mxu0 0.0
    %293 = vmatprep.subr.mxu0 0.0
    %294 = vmatpush1.msra.mxu0 0.0
    %295 = vmatprep.subr.mxu0 0.0
    %296 = vmatpush1.msra.mxu0 0.0
    %297 = vmatprep.subr.mxu0 0.0
    %298 = vmatpush1.msra.mxu0 0.0
    %299 = vmatprep.subr.mxu0 0.0
    %300 = vmatpush1.msra.mxu0 0.0
    %301 = vmatprep.subr.mxu0 0.0
    %302 = vmatpush1.msra.mxu0 0.0
    %303 = vmatprep.subr.mxu0 0.0
    %304 = vmatpush1.msra.mxu0 0.0
    %305 = vmatprep.mubr.f32.mxu0 0.0
    %306 = vmatmul.mubr.f32.gmra.mrb[0].mxu0 %v232
    %v307 = vpop.f32.mrb[0].mxu0
    %v308 = vadd.f32 0.0, %v307
    %v309 = vpop.f32.mrb[0].mxu0
    %310 = vmatprep.mubr.f32.mxu0 0.0
    %311 = vmatmul.mubr.f32.gmra.mrb[0].mxu0 %v235
    %v312 = vpop.f32.mrb[0].mxu0
    %v313 = vadd.f32 0.0, %v312
    %v314 = vpop.f32.mrb[0].mxu0
    %315 = vdwg.mxu0
    %v316 = vld [vmem:[%s2] sm:$0xff]
    %v317 = vld [vmem:[%s2 + $0x8] sm:$0xff]
    %v318 = vld [vmem:[%s2 + $0x10] sm:$0xff]
    %v319 = vld [vmem:[%s2 + $0x18] sm:$0xff]
    %v320 = vld [vmem:[%s2 + $0x20] sm:$0xff]
    %v322 = vsel %vm230, %v316, 0
    %v325 = vsel %vm230, %v317, 0
    %v328 = vsel %vm230, %v318, 0
    %v331 = vsel %vm230, %v319, 0
    %v334 = vsel %vm230, %v320, 0
    %336 = vmatprep.subr.mxu0 0.0
    %337 = vmatpush1.msra.mxu0 %v221
    %338 = vmatprep.subr.mxu0 0.0
    %339 = vmatpush1.msra.mxu0 %v222
    %340 = vmatprep.subr.mxu0 0.0
    %341 = vmatpush1.msra.mxu0 %v223
    %342 = vmatprep.subr.mxu0 0.0
    %343 = vmatpush1.msra.mxu0 %v224
    %344 = vmatprep.subr.mxu0 0.0
    %345 = vmatpush1.msra.mxu0 %v225
    %346 = vmatprep.subr.mxu0 0.0
    %347 = vmatpush1.msra.mxu0 %v226
    %348 = vmatprep.subr.mxu0 0.0
    %349 = vmatpush1.msra.mxu0 %v239
    %350 = vmatprep.subr.mxu0 0.0
    %351 = vmatpush1.msra.mxu0 0.0
    %352 = vmatprep.subr.mxu0 0.0
    %353 = vmatpush1.msra.mxu0 0.0
    %354 = vmatprep.subr.mxu0 0.0
    %355 = vmatpush1.msra.mxu0 0.0
    %356 = vmatprep.subr.mxu0 0.0
    %357 = vmatpush1.msra.mxu0 0.0
    %358 = vmatprep.subr.mxu0 0.0
    %359 = vmatpush1.msra.mxu0 0.0
    %360 = vmatprep.subr.mxu0 0.0
    %361 = vmatpush1.msra.mxu0 0.0
    %362 = vmatprep.subr.mxu0 0.0
    %363 = vmatpush1.msra.mxu0 0.0
    %364 = vmatprep.subr.mxu0 0.0
    %365 = vmatpush1.msra.mxu0 0.0
    %366 = vmatprep.subr.mxu0 0.0
    %367 = vmatpush1.msra.mxu0 0.0
    %368 = vmatprep.subr.mxu0 0.0
    %369 = vmatpush1.msra.mxu0 0.0
    %370 = vmatprep.subr.mxu0 0.0
    %371 = vmatpush1.msra.mxu0 0.0
    %372 = vmatprep.subr.mxu0 0.0
    %373 = vmatpush1.msra.mxu0 0.0
    %374 = vmatprep.subr.mxu0 0.0
    %375 = vmatpush1.msra.mxu0 0.0
    %376 = vmatprep.subr.mxu0 0.0
    %377 = vmatpush1.msra.mxu0 0.0
    %378 = vmatprep.subr.mxu0 0.0
    %379 = vmatpush1.msra.mxu0 0.0
    %380 = vmatprep.subr.mxu0 0.0
    %381 = vmatpush1.msra.mxu0 0.0
    %382 = vmatprep.subr.mxu0 0.0
    %383 = vmatpush1.msra.mxu0 0.0
    %384 = vmatprep.subr.mxu0 0.0
    %385 = vmatpush1.msra.mxu0 0.0
    %386 = vmatprep.subr.mxu0 0.0
    %387 = vmatpush1.msra.mxu0 0.0
    %388 = vmatprep.subr.mxu0 0.0
    %389 = vmatpush1.msra.mxu0 0.0
    %390 = vmatprep.subr.mxu0 0.0
    %391 = vmatpush1.msra.mxu0 0.0
    %392 = vmatprep.subr.mxu0 0.0
    %393 = vmatpush1.msra.mxu0 0.0
    %394 = vmatprep.subr.mxu0 0.0
    %395 = vmatpush1.msra.mxu0 0.0
    %396 = vmatprep.subr.mxu0 0.0
    %397 = vmatpush1.msra.mxu0 0.0
    %398 = vmatprep.subr.mxu0 0.0
    %399 = vmatpush1.msra.mxu0 0.0
    %400 = vmatprep.mubr.f32.mxu0 0.0
    %401 = vmatmul.mubr.f32.gmra.mrb[0].mxu0 %v322
    %v402 = vpop.f32.mrb[0].mxu0
    %v403 = vadd.f32 0.0, %v402
    %v404 = vpop.f32.mrb[0].mxu0
    %405 = vmatprep.mubr.f32.mxu0 0.0
    %406 = vmatmul.mubr.f32.gmra.mrb[0].mxu0 %v325
    %v407 = vpop.f32.mrb[0].mxu0
    %v408 = vadd.f32 0.0, %v407
    %v409 = vpop.f32.mrb[0].mxu0
    %410 = vmatprep.mubr.f32.mxu0 0.0
    %411 = vmatmul.mubr.f32.gmra.mrb[0].mxu0 %v328
    %v412 = vpop.f32.mrb[0].mxu0
    %v413 = vadd.f32 0.0, %v412
    %v414 = vpop.f32.mrb[0].mxu0
    %415 = vmatprep.mubr.f32.mxu0 0.0
    %416 = vmatmul.mubr.f32.gmra.mrb[0].mxu0 %v331
    %v417 = vpop.f32.mrb[0].mxu0
    %v418 = vadd.f32 0.0, %v417
    %v419 = vpop.f32.mrb[0].mxu0
    %420 = vmatprep.mubr.f32.mxu0 0.0
    %421 = vmatmul.mubr.f32.gmra.mrb[0].mxu0 %v334
    %v422 = vpop.f32.mrb[0].mxu0
    %v423 = vadd.f32 0.0, %v422
    %v424 = vpop.f32.mrb[0].mxu0
    %425 = vdwg.mxu0
    %v426 = vld [vmem:[%s5] sm:$0xf]
    %v427 = vld [vmem:[#allocation2] sm:$0xff]
    %v428 = vld [vmem:[#allocation2 + $0x8] sm:$0xff]
    %v429 = vld [vmem:[#allocation2 + $0x10] sm:$0xff]
    %v430 = vld [vmem:[#allocation2 + $0x18] sm:$0xff]
    %v431 = vld [vmem:[#allocation2 + $0x20] sm:$0xff]
    %v432 = vld [vmem:[#allocation2 + $0x28] sm:$0xff]
    %v433 = vld [vmem:[#allocation2 + $0x30] sm:$0xff]
    %v434 = vld [vmem:[#allocation2 + $0x38] sm:$0xff]
    %v435 = vld [vmem:[#allocation2 + $0x40] sm:$0xff]
    %v436 = vld [vmem:[#allocation2 + $0x48] sm:$0xff]
    %v437 = vld [vmem:[#allocation2 + $0x50] sm:$0xff]
    %v438 = vld [vmem:[#allocation2 + $0x58] sm:$0xff]
    %v439 = vld [vmem:[#allocation2 + $0x60] sm:$0xff]
    %v440 = vld [vmem:[#allocation2 + $0x68] sm:$0xff]
    %v441 = vld [vmem:[#allocation2 + $0x70] sm:$0xff]
    %v442 = vld [vmem:[#allocation2 + $0x78] sm:$0xff]
    %v443 = vlaneseq
    %v444 = vshrl.u32 %v443, 7
    %v445 = vsub.s32 0, %v444
    %v446 = vrot.slane %v426, %v445
    %447 = vmatprep.subr.mxu0 0.0
    %448 = vmatpush1.msra.mxu0 %v427
    %449 = vmatprep.subr.mxu0 0.0
    %450 = vmatpush1.msra.mxu0 %v428
    %451 = vmatprep.subr.mxu0 0.0
    %452 = vmatpush1.msra.mxu0 %v429
    %453 = vmatprep.subr.mxu0 0.0
    %454 = vmatpush1.msra.mxu0 %v430
    %455 = vmatprep.subr.mxu0 0.0
    %456 = vmatpush1.msra.mxu0 %v431
    %457 = vmatprep.subr.mxu0 0.0
    %458 = vmatpush1.msra.mxu0 %v432
    %459 = vmatprep.subr.mxu0 0.0
    %460 = vmatpush1.msra.mxu0 %v433
    %461 = vmatprep.subr.mxu0 0.0
    %462 = vmatpush1.msra.mxu0 %v434
    %463 = vmatprep.subr.mxu0 0.0
    %464 = vmatpush1.msra.mxu0 %v435
    %465 = vmatprep.subr.mxu0 0.0
    %466 = vmatpush1.msra.mxu0 %v436
    %467 = vmatprep.subr.mxu0 0.0
    %468 = vmatpush1.msra.mxu0 %v437
    %469 = vmatprep.subr.mxu0 0.0
    %470 = vmatpush1.msra.mxu0 %v438
    %471 = vmatprep.subr.mxu0 0.0
    %472 = vmatpush1.msra.mxu0 %v439
    %473 = vmatprep.subr.mxu0 0.0
    %474 = vmatpush1.msra.mxu0 %v440
    %475 = vmatprep.subr.mxu0 0.0
    %476 = vmatpush1.msra.mxu0 %v441
    %477 = vmatprep.subr.mxu0 0.0
    %478 = vmatpush1.msra.mxu0 %v442
    %479 = vmatprep.subr.mxu0 0.0
    %480 = vmatpush1.msra.mxu0 0.0
    %481 = vmatprep.subr.mxu0 0.0
    %482 = vmatpush1.msra.mxu0 0.0
    %483 = vmatprep.subr.mxu0 0.0
    %484 = vmatpush1.msra.mxu0 0.0
    %485 = vmatprep.subr.mxu0 0.0
    %486 = vmatpush1.msra.mxu0 0.0
    %487 = vmatprep.subr.mxu0 0.0
    %488 = vmatpush1.msra.mxu0 0.0
    %489 = vmatprep.subr.mxu0 0.0
    %490 = vmatpush1.msra.mxu0 0.0
    %491 = vmatprep.subr.mxu0 0.0
    %492 = vmatpush1.msra.mxu0 0.0
    %493 = vmatprep.subr.mxu0 0.0
    %494 = vmatpush1.msra.mxu0 0.0
    %495 = vmatprep.subr.mxu0 0.0
    %496 = vmatpush1.msra.mxu0 0.0
    %497 = vmatprep.subr.mxu0 0.0
    %498 = vmatpush1.msra.mxu0 0.0
    %499 = vmatprep.subr.mxu0 0.0
    %500 = vmatpush1.msra.mxu0 0.0
    %501 = vmatprep.subr.mxu0 0.0
    %502 = vmatpush1.msra.mxu0 0.0
    %503 = vmatprep.subr.mxu0 0.0
    %504 = vmatpush1.msra.mxu0 0.0
    %505 = vmatprep.subr.mxu0 0.0
    %506 = vmatpush1.msra.mxu0 0.0
    %507 = vmatprep.subr.mxu0 0.0
    %508 = vmatpush1.msra.mxu0 0.0
    %509 = vmatprep.subr.mxu0 0.0
    %510 = vmatpush1.msra.mxu0 0.0
    %511 = vmatprep.mubr.f32.mxu0 0.0
    %512 = vmatmul.mubr.f32.gmra.mrb[0].mxu0 %v308
    %v513 = vpop.f32.mrb[0].mxu0
    %v514 = vadd.f32 %v446, %v513
    %v515 = vpop.f32.mrb[0].mxu0
    %516 = vmatprep.mubr.f32.mxu0 0.0
    %517 = vmatmul.mubr.f32.gmra.mrb[0].mxu0 %v313
    %v518 = vpop.f32.mrb[0].mxu0
    %v519 = vadd.f32 %v446, %v518
    %v520 = vpop.f32.mrb[0].mxu0
    %521 = vdwg.mxu0
    %v522 = vpack.c.bf16 %v519, %v514
    %523 = vxpose.xlu0.c.b16.start [1/8] %v64, 128
    %524 = vxpose.xlu0.c.b16.cont [2/8] 0, 128
    %525 = vxpose.xlu0.c.b16.cont [3/8] 0, 128
    %526 = vxpose.xlu0.c.b16.cont [4/8] 0, 128
    %527 = vxpose.xlu0.c.b16.cont [5/8] 0, 128
    %528 = vxpose.xlu0.c.b16.cont [6/8] 0, 128
    %529 = vxpose.xlu0.c.b16.cont [7/8] 0, 128
    %530 = vxpose.xlu0.c.b16.end [8/8] 0, 128
    %v531 = vpop.trf.xlu0
    %v532 = vpop.trf.xlu0
    %v533 = vpop.trf.xlu0
    %v534 = vpop.trf.xlu0
    %v535 = vpop.trf.xlu0
    %v536 = vpop.trf.xlu0
    %v537 = vpop.trf.xlu0
    %v538 = vpop.trf.xlu0
    %v540 = vsel %vm115, %v531, 0
    %v543 = vsel %vm115, %v532, 0
    %v546 = vsel %vm115, %v533, 0
    %548 = vmatprep.subr.bf16.mxu0 0
    %549 = vmatpush1.bf16.msra.mxu0 %v522
    %550 = vmatprep.subr.bf16.mxu0 0
    %551 = vmatpush1.bf16.msra.mxu0 0
    %552 = vmatprep.subr.bf16.mxu0 0
    %553 = vmatpush1.bf16.msra.mxu0 0
    %554 = vmatprep.subr.bf16.mxu0 0
    %555 = vmatpush1.bf16.msra.mxu0 0
    %556 = vmatprep.subr.bf16.mxu0 0
    %557 = vmatpush1.bf16.msra.mxu0 0
    %558 = vmatprep.subr.bf16.mxu0 0
    %559 = vmatpush1.bf16.msra.mxu0 0
    %560 = vmatprep.subr.bf16.mxu0 0
    %561 = vmatpush1.bf16.msra.mxu0 0
    %562 = vmatprep.subr.bf16.mxu0 0
    %563 = vmatpush1.bf16.msra.mxu0 0
    %564 = vmatprep.subr.bf16.mxu0 0
    %565 = vmatpush1.bf16.msra.mxu0 0
    %566 = vmatprep.subr.bf16.mxu0 0
    %567 = vmatpush1.bf16.msra.mxu0 0
    %568 = vmatprep.subr.bf16.mxu0 0
    %569 = vmatpush1.bf16.msra.mxu0 0
    %570 = vmatprep.subr.bf16.mxu0 0
    %571 = vmatpush1.bf16.msra.mxu0 0
    %572 = vmatprep.subr.bf16.mxu0 0
    %573 = vmatpush1.bf16.msra.mxu0 0
    %574 = vmatprep.subr.bf16.mxu0 0
    %575 = vmatpush1.bf16.msra.mxu0 0
    %576 = vmatprep.subr.bf16.mxu0 0
    %577 = vmatpush1.bf16.msra.mxu0 0
    %578 = vmatprep.subr.bf16.mxu0 0
    %579 = vmatpush1.bf16.msra.mxu0 0
    %580 = vmatprep.mubr.bf16.mxu0 0
    %581 = vmatmul.mubr.bf16.gmra.mrb[0].mxu0 %v540
    %v582 = vpop.f32.mrb[0].mxu0
    %v583 = vadd.f32 %v403, %v582
    %v584 = vpop.f32.mrb[0].mxu0
    %v585 = vpop.f32.mrb[0].mxu0
    %v586 = vadd.f32 %v408, %v585
    %v587 = vpop.f32.mrb[0].mxu0
    %588 = vmatprep.mubr.bf16.mxu0 0
    %589 = vmatmul.mubr.bf16.gmra.mrb[0].mxu0 %v543
    %v590 = vpop.f32.mrb[0].mxu0
    %v591 = vadd.f32 %v413, %v590
    %v592 = vpop.f32.mrb[0].mxu0
    %v593 = vpop.f32.mrb[0].mxu0
    %v594 = vadd.f32 %v418, %v593
    %v595 = vpop.f32.mrb[0].mxu0
    %596 = vmatprep.mubr.bf16.mxu0 0
    %597 = vmatmul.mubr.bf16.gmra.mrb[0].mxu0 %v546
    %v598 = vpop.f32.mrb[0].mxu0
    %v599 = vadd.f32 %v423, %v598
    %v600 = vpop.f32.mrb[0].mxu0
    %v601 = vpop.f32.mrb[0].mxu0
    %v602 = vpop.f32.mrb[0].mxu0
    %603 = vdwg.mxu0
    %v604 = vmax.f32 %v583, 0.0
    %v605 = vmax.f32 %v586, 0.0
    %v606 = vmax.f32 %v591, 0.0
    %v607 = vmax.f32 %v594, 0.0
    %v608 = vmax.f32 %v599, 0.0
    %610 = vset.pattern.permute.xlu0 0
    %611 = vperm.xlu0 %610, %v198
    %v612 = vpop.permute.xlu0 %611
    %615 = vset.pattern.permute.xlu0 0
    %616 = vperm.xlu0 %615, %v203
    %v617 = vpop.permute.xlu0 %616
    %620 = vset.pattern.permute.xlu0 0
    %621 = vperm.xlu0 %620, %v208
    %v622 = vpop.permute.xlu0 %621
    %625 = vset.pattern.permute.xlu0 0
    %626 = vperm.xlu0 %625, %v213
    %v627 = vpop.permute.xlu0 %626
    %630 = vset.pattern.permute.xlu0 0
    %631 = vperm.xlu0 %630, %v218
    %v632 = vpop.permute.xlu0 %631
    %v634 = vmul.f32 %v604, %v612
    %v635 = vmul.f32 %v605, %v617
    %v636 = vmul.f32 %v606, %v622
    %v637 = vmul.f32 %v607, %v627
    %v638 = vmul.f32 %v608, %v632
    %v639 = vpack.c.bf16 %v635, %v634
    %v640 = vpack.c.bf16 %v637, %v636
    %v641 = vpack.c.bf16 %v638, %v638
    %v643 = vsel %vm70, %v69, 0
    %v646 = vsel %vm237, %v641, 0
    %648 = vmatprep.subr.bf16.mxu0 0
    %649 = vmatpush1.bf16.msra.mxu0 %v639
    %650 = vmatprep.subr.bf16.mxu0 0
    %651 = vmatpush1.bf16.msra.mxu0 %v640
    %652 = vmatprep.subr.bf16.mxu0 0
    %653 = vmatpush1.bf16.msra.mxu0 %v646
    %654 = vmatprep.subr.bf16.mxu0 0
    %655 = vmatpush1.bf16.msra.mxu0 0
    %656 = vmatprep.subr.bf16.mxu0 0
    %657 = vmatpush1.bf16.msra.mxu0 0
    %658 = vmatprep.subr.bf16.mxu0 0
    %659 = vmatpush1.bf16.msra.mxu0 0
    %660 = vmatprep.subr.bf16.mxu0 0
    %661 = vmatpush1.bf16.msra.mxu0 0
    %662 = vmatprep.subr.bf16.mxu0 0
    %663 = vmatpush1.bf16.msra.mxu0 0
    %664 = vmatprep.subr.bf16.mxu0 0
    %665 = vmatpush1.bf16.msra.mxu0 0
    %666 = vmatprep.subr.bf16.mxu0 0
    %667 = vmatpush1.bf16.msra.mxu0 0
    %668 = vmatprep.subr.bf16.mxu0 0
    %669 = vmatpush1.bf16.msra.mxu0 0
    %670 = vmatprep.subr.bf16.mxu0 0
    %671 = vmatpush1.bf16.msra.mxu0 0
    %672 = vmatprep.subr.bf16.mxu0 0
    %673 = vmatpush1.bf16.msra.mxu0 0
    %674 = vmatprep.subr.bf16.mxu0 0
    %675 = vmatpush1.bf16.msra.mxu0 0
    %676 = vmatprep.subr.bf16.mxu0 0
    %677 = vmatpush1.bf16.msra.mxu0 0
    %678 = vmatprep.subr.bf16.mxu0 0
    %679 = vmatpush1.bf16.msra.mxu0 0
    %680 = vmatprep.mubr.bf16.mxu0 0
    %681 = vmatmul.mubr.bf16.gmra.mrb[0].mxu0 %v643
    %v682 = vpop.f32.mrb[0].mxu0
    %v683 = vadd.f32 0.0, %v682
    %v684 = vpop.f32.mrb[0].mxu0
    %v685 = vpop.f32.mrb[0].mxu0
    %v686 = vadd.f32 0.0, %v685
    %v687 = vpop.f32.mrb[0].mxu0
    %688 = vdwg.mxu0
    %v689 = vmul.f32 %v683, %v79
    %v690 = vmul.f32 %v686, %v80
    %v691 = vlaneseq
    %v692 = vshrl.u32 %v691, 7
    %v693 = vsub.s32 1, %v692
    %v694 = vrot.slane %v426, %v693
    %v695 = vadd.f32 %v514, %v694
    %v696 = vadd.f32 %v519, %v694
    %v697 = vmax.f32 %v695, 0.0
    %v698 = vmax.f32 %v696, 0.0
    %v699 = vmul.f32 %v697, %v81
    %v700 = vmul.f32 %v698, %v82
    %v701 = vadd.f32 %v689, %v699
    %v702 = vadd.f32 %v690, %v700
    %v703 = vadd.f32 %v308, %v701
    %v704 = vadd.f32 %v313, %v702
    %v705 = vlaneseq
    %v706 = vshrl.u32 %v705, 7
    %v707 = vsub.s32 2, %v706
    %v708 = vrot.slane %v426, %v707
    %v709 = vmul.f32 %v703, %v708
    %v710 = vmul.f32 %v704, %v708
    %v711 = vlaneseq
    %v712 = vshrl.u32 %v711, 7
    %v713 = vsub.s32 3, %v712
    %v714 = vrot.slane %v426, %v713
    %v715 = vadd.f32 %v709, %v714
    %v716 = vadd.f32 %v710, %v714
    %v717 = vmax.f32 %v715, 0.0
    %v718 = vmax.f32 %v716, 0.0
    %s719 = scalar_lea.vmem %s5, 4
    %v720 = vld [vmem:[%s719] sm:$0xf]
    %s721 = scalar_lea.vmem [#allocation2], 128
    %v722 = vld [vmem:[%s721] sm:$0xff]
    %v723 = vld [vmem:[%s721 + $0x8] sm:$0xff]
    %v724 = vld [vmem:[%s721 + $0x10] sm:$0xff]
    %v725 = vld [vmem:[%s721 + $0x18] sm:$0xff]
    %v726 = vld [vmem:[%s721 + $0x20] sm:$0xff]
    %v727 = vld [vmem:[%s721 + $0x28] sm:$0xff]
    %v728 = vld [vmem:[%s721 + $0x30] sm:$0xff]
    %v729 = vld [vmem:[%s721 + $0x38] sm:$0xff]
    %v730 = vld [vmem:[%s721 + $0x40] sm:$0xff]
    %v731 = vld [vmem:[%s721 + $0x48] sm:$0xff]
    %v732 = vld [vmem:[%s721 + $0x50] sm:$0xff]
    %v733 = vld [vmem:[%s721 + $0x58] sm:$0xff]
    %v734 = vld [vmem:[%s721 + $0x60] sm:$0xff]
    %v735 = vld [vmem:[%s721 + $0x68] sm:$0xff]
    %v736 = vld [vmem:[%s721 + $0x70] sm:$0xff]
    %v737 = vld [vmem:[%s721 + $0x78] sm:$0xff]
    %v738 = vlaneseq
    %v739 = vshrl.u32 %v738, 7
    %v740 = vsub.s32 0, %v739
    %v741 = vrot.slane %v720, %v740
    %742 = vmatprep.subr.mxu0 0.0
    %743 = vmatpush1.msra.mxu0 %v722
    %744 = vmatprep.subr.mxu0 0.0
    %745 = vmatpush1.msra.mxu0 %v723
    %746 = vmatprep.subr.mxu0 0.0
    %747 = vmatpush1.msra.mxu0 %v724
    %748 = vmatprep.subr.mxu0 0.0
    %749 = vmatpush1.msra.mxu0 %v725
    %750 = vmatprep.subr.mxu0 0.0
    %751 = vmatpush1.msra.mxu0 %v726
    %752 = vmatprep.subr.mxu0 0.0
    %753 = vmatpush1.msra.mxu0 %v727
    %754 = vmatprep.subr.mxu0 0.0
    %755 = vmatpush1.msra.mxu0 %v728
    %756 = vmatprep.subr.mxu0 0.0
    %757 = vmatpush1.msra.mxu0 %v729
    %758 = vmatprep.subr.mxu0 0.0
    %759 = vmatpush1.msra.mxu0 %v730
    %760 = vmatprep.subr.mxu0 0.0
    %761 = vmatpush1.msra.mxu0 %v731
    %762 = vmatprep.subr.mxu0 0.0
    %763 = vmatpush1.msra.mxu0 %v732
    %764 = vmatprep.subr.mxu0 0.0
    %765 = vmatpush1.msra.mxu0 %v733
    %766 = vmatprep.subr.mxu0 0.0
    %767 = vmatpush1.msra.mxu0 %v734
    %768 = vmatprep.subr.mxu0 0.0
    %769 = vmatpush1.msra.mxu0 %v735
    %770 = vmatprep.subr.mxu0 0.0
    %771 = vmatpush1.msra.mxu0 %v736
    %772 = vmatprep.subr.mxu0 0.0
    %773 = vmatpush1.msra.mxu0 %v737
    %774 = vmatprep.subr.mxu0 0.0
    %775 = vmatpush1.msra.mxu0 0.0
    %776 = vmatprep.subr.mxu0 0.0
    %777 = vmatpush1.msra.mxu0 0.0
    %778 = vmatprep.subr.mxu0 0.0
    %779 = vmatpush1.msra.mxu0 0.0
    %780 = vmatprep.subr.mxu0 0.0
    %781 = vmatpush1.msra.mxu0 0.0
    %782 = vmatprep.subr.mxu0 0.0
    %783 = vmatpush1.msra.mxu0 0.0
    %784 = vmatprep.subr.mxu0 0.0
    %785 = vmatpush1.msra.mxu0 0.0
    %786 = vmatprep.subr.mxu0 0.0
    %787 = vmatpush1.msra.mxu0 0.0
    %788 = vmatprep.subr.mxu0 0.0
    %789 = vmatpush1.msra.mxu0 0.0
    %790 = vmatprep.subr.mxu0 0.0
    %791 = vmatpush1.msra.mxu0 0.0
    %792 = vmatprep.subr.mxu0 0.0
    %793 = vmatpush1.msra.mxu0 0.0
    %794 = vmatprep.subr.mxu0 0.0
    %795 = vmatpush1.msra.mxu0 0.0
    %796 = vmatprep.subr.mxu0 0.0
    %797 = vmatpush1.msra.mxu0 0.0
    %798 = vmatprep.subr.mxu0 0.0
    %799 = vmatpush1.msra.mxu0 0.0
    %800 = vmatprep.subr.mxu0 0.0
    %801 = vmatpush1.msra.mxu0 0.0
    %802 = vmatprep.subr.mxu0 0.0
    %803 = vmatpush1.msra.mxu0 0.0
    %804 = vmatprep.subr.mxu0 0.0
    %805 = vmatpush1.msra.mxu0 0.0
    %806 = vmatprep.mubr.f32.mxu0 0.0
    %807 = vmatmul.mubr.f32.gmra.mrb[0].mxu0 %v717
    %v808 = vpop.f32.mrb[0].mxu0
    %v809 = vadd.f32 %v741, %v808
    %v810 = vpop.f32.mrb[0].mxu0
    %811 = vmatprep.mubr.f32.mxu0 0.0
    %812 = vmatmul.mubr.f32.gmra.mrb[0].mxu0 %v718
    %v813 = vpop.f32.mrb[0].mxu0
    %v814 = vadd.f32 %v741, %v813
    %v815 = vpop.f32.mrb[0].mxu0
    %816 = vdwg.mxu0
    %v817 = vpack.c.bf16 %v814, %v809
    %818 = vmatprep.subr.bf16.mxu0 0
    %819 = vmatpush1.bf16.msra.mxu0 %v817
    %820 = vmatprep.subr.bf16.mxu0 0
    %821 = vmatpush1.bf16.msra.mxu0 0
    %822 = vmatprep.subr.bf16.mxu0 0
    %823 = vmatpush1.bf16.msra.mxu0 0
    %824 = vmatprep.subr.bf16.mxu0 0
    %825 = vmatpush1.bf16.msra.mxu0 0
    %826 = vmatprep.subr.bf16.mxu0 0
    %827 = vmatpush1.bf16.msra.mxu0 0
    %828 = vmatprep.subr.bf16.mxu0 0
    %829 = vmatpush1.bf16.msra.mxu0 0
    %830 = vmatprep.subr.bf16.mxu0 0
    %831 = vmatpush1.bf16.msra.mxu0 0
    %832 = vmatprep.subr.bf16.mxu0 0
    %833 = vmatpush1.bf16.msra.mxu0 0
    %834 = vmatprep.subr.bf16.mxu0 0
    %835 = vmatpush1.bf16.msra.mxu0 0
    %836 = vmatprep.subr.bf16.mxu0 0
    %837 = vmatpush1.bf16.msra.mxu0 0
    %838 = vmatprep.subr.bf16.mxu0 0
    %839 = vmatpush1.bf16.msra.mxu0 0
    %840 = vmatprep.subr.bf16.mxu0 0
    %841 = vmatpush1.bf16.msra.mxu0 0
    %842 = vmatprep.subr.bf16.mxu0 0
    %843 = vmatpush1.bf16.msra.mxu0 0
    %844 = vmatprep.subr.bf16.mxu0 0
    %845 = vmatpush1.bf16.msra.mxu0 0
    %846 = vmatprep.subr.bf16.mxu0 0
    %847 = vmatpush1.bf16.msra.mxu0 0
    %848 = vmatprep.subr.bf16.mxu0 0
    %849 = vmatpush1.bf16.msra.mxu0 0
    %850 = vmatprep.mubr.bf16.mxu0 0
    %851 = vmatmul.mubr.bf16.gmra.mrb[0].mxu0 %v540
    %v852 = vpop.f32.mrb[0].mxu0
    %v853 = vadd.f32 %v403, %v852
    %v854 = vpop.f32.mrb[0].mxu0
    %v855 = vpop.f32.mrb[0].mxu0
    %v856 = vadd.f32 %v408, %v855
    %v857 = vpop.f32.mrb[0].mxu0
    %858 = vmatprep.mubr.bf16.mxu0 0
    %859 = vmatmul.mubr.bf16.gmra.mrb[0].mxu0 %v543
    %v860 = vpop.f32.mrb[0].mxu0
    %v861 = vadd.f32 %v413, %v860
    %v862 = vpop.f32.mrb[0].mxu0
    %v863 = vpop.f32.mrb[0].mxu0
    %v864 = vadd.f32 %v418, %v863
    %v865 = vpop.f32.mrb[0].mxu0
    %866 = vmatprep.mubr.bf16.mxu0 0
    %867 = vmatmul.mubr.bf16.gmra.mrb[0].mxu0 %v546
    %v868 = vpop.f32.mrb[0].mxu0
    %v869 = vadd.f32 %v423, %v868
    %v870 = vpop.f32.mrb[0].mxu0
    %v871 = vpop.f32.mrb[0].mxu0
    %v872 = vpop.f32.mrb[0].mxu0
    %873 = vdwg.mxu0
    %v874 = vmax.f32 %v853, 0.0
    %v875 = vmax.f32 %v856, 0.0
    %v876 = vmax.f32 %v861, 0.0
    %v877 = vmax.f32 %v864, 0.0
    %v878 = vmax.f32 %v869, 0.0
    %v879 = vmul.f32 %v874, %v612
    %v880 = vmul.f32 %v875, %v617
    %v881 = vmul.f32 %v876, %v622
    %v882 = vmul.f32 %v877, %v627
    %v883 = vmul.f32 %v878, %v632
    %v884 = vpack.c.bf16 %v880, %v879
    %v885 = vpack.c.bf16 %v882, %v881
    %v886 = vpack.c.bf16 %v883, %v883
    %v888 = vsel %vm237, %v886, 0
    %890 = vmatprep.subr.bf16.mxu0 0
    %891 = vmatpush1.bf16.msra.mxu0 %v884
    %892 = vmatprep.subr.bf16.mxu0 0
    %893 = vmatpush1.bf16.msra.mxu0 %v885
    %894 = vmatprep.subr.bf16.mxu0 0
    %895 = vmatpush1.bf16.msra.mxu0 %v888
    %896 = vmatprep.subr.bf16.mxu0 0
    %897 = vmatpush1.bf16.msra.mxu0 0
    %898 = vmatprep.subr.bf16.mxu0 0
    %899 = vmatpush1.bf16.msra.mxu0 0
    %900 = vmatprep.subr.bf16.mxu0 0
    %901 = vmatpush1.bf16.msra.mxu0 0
    %902 = vmatprep.subr.bf16.mxu0 0
    %903 = vmatpush1.bf16.msra.mxu0 0
    %904 = vmatprep.subr.bf16.mxu0 0
    %905 = vmatpush1.bf16.msra.mxu0 0
    %906 = vmatprep.subr.bf16.mxu0 0
    %907 = vmatpush1.bf16.msra.mxu0 0
    %908 = vmatprep.subr.bf16.mxu0 0
    %909 = vmatpush1.bf16.msra.mxu0 0
    %910 = vmatprep.subr.bf16.mxu0 0
    %911 = vmatpush1.bf16.msra.mxu0 0
    %912 = vmatprep.subr.bf16.mxu0 0
    %913 = vmatpush1.bf16.msra.mxu0 0
    %914 = vmatprep.subr.bf16.mxu0 0
    %915 = vmatpush1.bf16.msra.mxu0 0
    %916 = vmatprep.subr.bf16.mxu0 0
    %917 = vmatpush1.bf16.msra.mxu0 0
    %918 = vmatprep.subr.bf16.mxu0 0
    %919 = vmatpush1.bf16.msra.mxu0 0
    %920 = vmatprep.subr.bf16.mxu0 0
    %921 = vmatpush1.bf16.msra.mxu0 0
    %922 = vmatprep.mubr.bf16.mxu0 0
    %923 = vmatmul.mubr.bf16.gmra.mrb[0].mxu0 %v643
    %v924 = vpop.f32.mrb[0].mxu0
    %v925 = vadd.f32 0.0, %v924
    %v926 = vpop.f32.mrb[0].mxu0
    %v927 = vpop.f32.mrb[0].mxu0
    %v928 = vadd.f32 0.0, %v927
    %v929 = vpop.f32.mrb[0].mxu0
    %930 = vdwg.mxu0
    %v931 = vmul.f32 %v925, %v79
    %v932 = vmul.f32 %v928, %v80
    %v933 = vlaneseq
    %v934 = vshrl.u32 %v933, 7
    %v935 = vsub.s32 1, %v934
    %v936 = vrot.slane %v720, %v935
    %v937 = vadd.f32 %v809, %v936
    %v938 = vadd.f32 %v814, %v936
    %v939 = vmax.f32 %v937, 0.0
    %v940 = vmax.f32 %v938, 0.0
    %v941 = vmul.f32 %v939, %v81
    %v942 = vmul.f32 %v940, %v82
    %v943 = vadd.f32 %v931, %v941
    %v944 = vadd.f32 %v932, %v942
    %v945 = vadd.f32 %v717, %v943
    %v946 = vadd.f32 %v718, %v944
    %v947 = vlaneseq
    %v948 = vshrl.u32 %v947, 7
    %v949 = vsub.s32 2, %v948
    %v950 = vrot.slane %v720, %v949
    %v951 = vmul.f32 %v945, %v950
    %v952 = vmul.f32 %v946, %v950
    %v953 = vlaneseq
    %v954 = vshrl.u32 %v953, 7
    %v955 = vsub.s32 3, %v954
    %v956 = vrot.slane %v720, %v955
    %v957 = vadd.f32 %v951, %v956
    %v958 = vadd.f32 %v952, %v956
    %v959 = vmax.f32 %v957, 0.0
    %v960 = vmax.f32 %v958, 0.0
    %s961 = scalar_lea.vmem %s5, 8
    %v962 = vld [vmem:[%s961] sm:$0xf]
    %s963 = scalar_lea.vmem [#allocation2], 256
    %v964 = vld [vmem:[%s963] sm:$0xff]
    %v965 = vld [vmem:[%s963 + $0x8] sm:$0xff]
    %v966 = vld [vmem:[%s963 + $0x10] sm:$0xff]
    %v967 = vld [vmem:[%s963 + $0x18] sm:$0xff]
    %v968 = vld [vmem:[%s963 + $0x20] sm:$0xff]
    %v969 = vld [vmem:[%s963 + $0x28] sm:$0xff]
    %v970 = vld [vmem:[%s963 + $0x30] sm:$0xff]
    %v971 = vld [vmem:[%s963 + $0x38] sm:$0xff]
    %v972 = vld [vmem:[%s963 + $0x40] sm:$0xff]
    %v973 = vld [vmem:[%s963 + $0x48] sm:$0xff]
    %v974 = vld [vmem:[%s963 + $0x50] sm:$0xff]
    %v975 = vld [vmem:[%s963 + $0x58] sm:$0xff]
    %v976 = vld [vmem:[%s963 + $0x60] sm:$0xff]
    %v977 = vld [vmem:[%s963 + $0x68] sm:$0xff]
    %v978 = vld [vmem:[%s963 + $0x70] sm:$0xff]
    %v979 = vld [vmem:[%s963 + $0x78] sm:$0xff]
    %v980 = vlaneseq
    %v981 = vshrl.u32 %v980, 7
    %v982 = vsub.s32 0, %v981
    %v983 = vrot.slane %v962, %v982
    %984 = vmatprep.subr.mxu0 0.0
    %985 = vmatpush1.msra.mxu0 %v964
    %986 = vmatprep.subr.mxu0 0.0
    %987 = vmatpush1.msra.mxu0 %v965
    %988 = vmatprep.subr.mxu0 0.0
    %989 = vmatpush1.msra.mxu0 %v966
    %990 = vmatprep.subr.mxu0 0.0
    %991 = vmatpush1.msra.mxu0 %v967
    %992 = vmatprep.subr.mxu0 0.0
    %993 = vmatpush1.msra.mxu0 %v968
    %994 = vmatprep.subr.mxu0 0.0
    %995 = vmatpush1.msra.mxu0 %v969
    %996 = vmatprep.subr.mxu0 0.0
    %997 = vmatpush1.msra.mxu0 %v970
    %998 = vmatprep.subr.mxu0 0.0
    %999 = vmatpush1.msra.mxu0 %v971
    %1000 = vmatprep.subr.mxu0 0.0
    %1001 = vmatpush1.msra.mxu0 %v972
    %1002 = vmatprep.subr.mxu0 0.0
    %1003 = vmatpush1.msra.mxu0 %v973
    %1004 = vmatprep.subr.mxu0 0.0
    %1005 = vmatpush1.msra.mxu0 %v974
    %1006 = vmatprep.subr.mxu0 0.0
    %1007 = vmatpush1.msra.mxu0 %v975
    %1008 = vmatprep.subr.mxu0 0.0
    %1009 = vmatpush1.msra.mxu0 %v976
    %1010 = vmatprep.subr.mxu0 0.0
    %1011 = vmatpush1.msra.mxu0 %v977
    %1012 = vmatprep.subr.mxu0 0.0
    %1013 = vmatpush1.msra.mxu0 %v978
    %1014 = vmatprep.subr.mxu0 0.0
    %1015 = vmatpush1.msra.mxu0 %v979
    %1016 = vmatprep.subr.mxu0 0.0
    %1017 = vmatpush1.msra.mxu0 0.0
    %1018 = vmatprep.subr.mxu0 0.0
    %1019 = vmatpush1.msra.mxu0 0.0
    %1020 = vmatprep.subr.mxu0 0.0
    %1021 = vmatpush1.msra.mxu0 0.0
    %1022 = vmatprep.subr.mxu0 0.0
    %1023 = vmatpush1.msra.mxu0 0.0
    %1024 = vmatprep.subr.mxu0 0.0
    %1025 = vmatpush1.msra.mxu0 0.0
    %1026 = vmatprep.subr.mxu0 0.0
    %1027 = vmatpush1.msra.mxu0 0.0
    %1028 = vmatprep.subr.mxu0 0.0
    %1029 = vmatpush1.msra.mxu0 0.0
    %1030 = vmatprep.subr.mxu0 0.0
    %1031 = vmatpush1.msra.mxu0 0.0
    %1032 = vmatprep.subr.mxu0 0.0
    %1033 = vmatpush1.msra.mxu0 0.0
    %1034 = vmatprep.subr.mxu0 0.0
    %1035 = vmatpush1.msra.mxu0 0.0
    %1036 = vmatprep.subr.mxu0 0.0
    %1037 = vmatpush1.msra.mxu0 0.0
    %1038 = vmatprep.subr.mxu0 0.0
    %1039 = vmatpush1.msra.mxu0 0.0
    %1040 = vmatprep.subr.mxu0 0.0
    %1041 = vmatpush1.msra.mxu0 0.0
    %1042 = vmatprep.subr.mxu0 0.0
    %1043 = vmatpush1.msra.mxu0 0.0
    %1044 = vmatprep.subr.mxu0 0.0
    %1045 = vmatpush1.msra.mxu0 0.0
    %1046 = vmatprep.subr.mxu0 0.0
    %1047 = vmatpush1.msra.mxu0 0.0
    %1048 = vmatprep.mubr.f32.mxu0 0.0
    %1049 = vmatmul.mubr.f32.gmra.mrb[0].mxu0 %v959
    %v1050 = vpop.f32.mrb[0].mxu0
    %v1051 = vadd.f32 %v983, %v1050
    %v1052 = vpop.f32.mrb[0].mxu0
    %1053 = vmatprep.mubr.f32.mxu0 0.0
    %1054 = vmatmul.mubr.f32.gmra.mrb[0].mxu0 %v960
    %v1055 = vpop.f32.mrb[0].mxu0
    %v1056 = vadd.f32 %v983, %v1055
    %v1057 = vpop.f32.mrb[0].mxu0
    %1058 = vdwg.mxu0
    %v1059 = vpack.c.bf16 %v1056, %v1051
    %1060 = vmatprep.subr.bf16.mxu0 0
    %1061 = vmatpush1.bf16.msra.mxu0 %v1059
    %1062 = vmatprep.subr.bf16.mxu0 0
    %1063 = vmatpush1.bf16.msra.mxu0 0
    %1064 = vmatprep.subr.bf16.mxu0 0
    %1065 = vmatpush1.bf16.msra.mxu0 0
    %1066 = vmatprep.subr.bf16.mxu0 0
    %1067 = vmatpush1.bf16.msra.mxu0 0
    %1068 = vmatprep.subr.bf16.mxu0 0
    %1069 = vmatpush1.bf16.msra.mxu0 0
    %1070 = vmatprep.subr.bf16.mxu0 0
    %1071 = vmatpush1.bf16.msra.mxu0 0
    %1072 = vmatprep.subr.bf16.mxu0 0
    %1073 = vmatpush1.bf16.msra.mxu0 0
    %1074 = vmatprep.subr.bf16.mxu0 0
    %1075 = vmatpush1.bf16.msra.mxu0 0
    %1076 = vmatprep.subr.bf16.mxu0 0
    %1077 = vmatpush1.bf16.msra.mxu0 0
    %1078 = vmatprep.subr.bf16.mxu0 0
    %1079 = vmatpush1.bf16.msra.mxu0 0
    %1080 = vmatprep.subr.bf16.mxu0 0
    %1081 = vmatpush1.bf16.msra.mxu0 0
    %1082 = vmatprep.subr.bf16.mxu0 0
    %1083 = vmatpush1.bf16.msra.mxu0 0
    %1084 = vmatprep.subr.bf16.mxu0 0
    %1085 = vmatpush1.bf16.msra.mxu0 0
    %1086 = vmatprep.subr.bf16.mxu0 0
    %1087 = vmatpush1.bf16.msra.mxu0 0
    %1088 = vmatprep.subr.bf16.mxu0 0
    %1089 = vmatpush1.bf16.msra.mxu0 0
    %1090 = vmatprep.subr.bf16.mxu0 0
    %1091 = vmatpush1.bf16.msra.mxu0 0
    %1092 = vmatprep.mubr.bf16.mxu0 0
    %1093 = vmatmul.mubr.bf16.gmra.mrb[0].mxu0 %v540
    %v1094 = vpop.f32.mrb[0].mxu0
    %v1095 = vadd.f32 %v403, %v1094
    %v1096 = vpop.f32.mrb[0].mxu0
    %v1097 = vpop.f32.mrb[0].mxu0
    %v1098 = vadd.f32 %v408, %v1097
    %v1099 = vpop.f32.mrb[0].mxu0
    %1100 = vmatprep.mubr.bf16.mxu0 0
    %1101 = vmatmul.mubr.bf16.gmra.mrb[0].mxu0 %v543
    %v1102 = vpop.f32.mrb[0].mxu0
    %v1103 = vadd.f32 %v413, %v1102
    %v1104 = vpop.f32.mrb[0].mxu0
    %v1105 = vpop.f32.mrb[0].mxu0
    %v1106 = vadd.f32 %v418, %v1105
    %v1107 = vpop.f32.mrb[0].mxu0
    %1108 = vmatprep.mubr.bf16.mxu0 0
    %1109 = vmatmul.mubr.bf16.gmra.mrb[0].mxu0 %v546
    %v1110 = vpop.f32.mrb[0].mxu0
    %v1111 = vadd.f32 %v423, %v1110
    %v1112 = vpop.f32.mrb[0].mxu0
    %v1113 = vpop.f32.mrb[0].mxu0
    %v1114 = vpop.f32.mrb[0].mxu0
    %1115 = vdwg.mxu0
    %v1116 = vmax.f32 %v1095, 0.0
    %v1117 = vmax.f32 %v1098, 0.0
    %v1118 = vmax.f32 %v1103, 0.0
    %v1119 = vmax.f32 %v1106, 0.0
    %v1120 = vmax.f32 %v1111, 0.0
    %v1121 = vmul.f32 %v1116, %v612
    %v1122 = vmul.f32 %v1117, %v617
    %v1123 = vmul.f32 %v1118, %v622
    %v1124 = vmul.f32 %v1119, %v627
    %v1125 = vmul.f32 %v1120, %v632
    %v1126 = vpack.c.bf16 %v1122, %v1121
    %v1127 = vpack.c.bf16 %v1124, %v1123
    %v1128 = vpack.c.bf16 %v1125, %v1125
    %v1130 = vsel %vm237, %v1128, 0
    %1132 = vmatprep.subr.bf16.mxu0 0
    %1133 = vmatpush1.bf16.msra.mxu0 %v1126
    %1134 = vmatprep.subr.bf16.mxu0 0
    %1135 = vmatpush1.bf16.msra.mxu0 %v1127
    %1136 = vmatprep.subr.bf16.mxu0 0
    %1137 = vmatpush1.bf16.msra.mxu0 %v1130
    %1138 = vmatprep.subr.bf16.mxu0 0
    %1139 = vmatpush1.bf16.msra.mxu0 0
    %1140 = vmatprep.subr.bf16.mxu0 0
    %1141 = vmatpush1.bf16.msra.mxu0 0
    %1142 = vmatprep.subr.bf16.mxu0 0
    %1143 = vmatpush1.bf16.msra.mxu0 0
    %1144 = vmatprep.subr.bf16.mxu0 0
    %1145 = vmatpush1.bf16.msra.mxu0 0
    %1146 = vmatprep.subr.bf16.mxu0 0
    %1147 = vmatpush1.bf16.msra.mxu0 0
    %1148 = vmatprep.subr.bf16.mxu0 0
    %1149 = vmatpush1.bf16.msra.mxu0 0
    %1150 = vmatprep.subr.bf16.mxu0 0
    %1151 = vmatpush1.bf16.msra.mxu0 0
    %1152 = vmatprep.subr.bf16.mxu0 0
    %1153 = vmatpush1.bf16.msra.mxu0 0
    %1154 = vmatprep.subr.bf16.mxu0 0
    %1155 = vmatpush1.bf16.msra.mxu0 0
    %1156 = vmatprep.subr.bf16.mxu0 0
    %1157 = vmatpush1.bf16.msra.mxu0 0
    %1158 = vmatprep.subr.bf16.mxu0 0
    %1159 = vmatpush1.bf16.msra.mxu0 0
    %1160 = vmatprep.subr.bf16.mxu0 0
    %1161 = vmatpush1.bf16.msra.mxu0 0
    %1162 = vmatprep.subr.bf16.mxu0 0
    %1163 = vmatpush1.bf16.msra.mxu0 0
    %1164 = vmatprep.mubr.bf16.mxu0 0
    %1165 = vmatmul.mubr.bf16.gmra.mrb[0].mxu0 %v643
    %v1166 = vpop.f32.mrb[0].mxu0
    %v1167 = vadd.f32 0.0, %v1166
    %v1168 = vpop.f32.mrb[0].mxu0
    %v1169 = vpop.f32.mrb[0].mxu0
    %v1170 = vadd.f32 0.0, %v1169
    %v1171 = vpop.f32.mrb[0].mxu0
    %1172 = vdwg.mxu0
    %v1173 = vmul.f32 %v1167, %v79
    %v1174 = vmul.f32 %v1170, %v80
    %v1175 = vlaneseq
    %v1176 = vshrl.u32 %v1175, 7
    %v1177 = vsub.s32 1, %v1176
    %v1178 = vrot.slane %v962, %v1177
    %v1179 = vadd.f32 %v1051, %v1178
    %v1180 = vadd.f32 %v1056, %v1178
    %v1181 = vmax.f32 %v1179, 0.0
    %v1182 = vmax.f32 %v1180, 0.0
    %v1183 = vmul.f32 %v1181, %v81
    %v1184 = vmul.f32 %v1182, %v82
    %v1185 = vadd.f32 %v1173, %v1183
    %v1186 = vadd.f32 %v1174, %v1184
    %v1187 = vadd.f32 %v959, %v1185
    %v1188 = vadd.f32 %v960, %v1186
    %v1189 = vlaneseq
    %v1190 = vshrl.u32 %v1189, 7
    %v1191 = vsub.s32 2, %v1190
    %v1192 = vrot.slane %v962, %v1191
    %v1193 = vmul.f32 %v1187, %v1192
    %v1194 = vmul.f32 %v1188, %v1192
    %v1195 = vlaneseq
    %v1196 = vshrl.u32 %v1195, 7
    %v1197 = vsub.s32 3, %v1196
    %v1198 = vrot.slane %v962, %v1197
    %v1199 = vadd.f32 %v1193, %v1198
    %v1200 = vadd.f32 %v1194, %v1198
    %v1201 = vmax.f32 %v1199, 0.0
    %v1202 = vmax.f32 %v1200, 0.0
    %s1203 = scalar_lea.vmem %s5, 12
    %v1204 = vld [vmem:[%s1203] sm:$0xf]
    %s1205 = scalar_lea.vmem [#allocation2], 384
    %v1206 = vld [vmem:[%s1205] sm:$0xff]
    %v1207 = vld [vmem:[%s1205 + $0x8] sm:$0xff]
    %v1208 = vld [vmem:[%s1205 + $0x10] sm:$0xff]
    %v1209 = vld [vmem:[%s1205 + $0x18] sm:$0xff]
    %v1210 = vld [vmem:[%s1205 + $0x20] sm:$0xff]
    %v1211 = vld [vmem:[%s1205 + $0x28] sm:$0xff]
    %v1212 = vld [vmem:[%s1205 + $0x30] sm:$0xff]
    %v1213 = vld [vmem:[%s1205 + $0x38] sm:$0xff]
    %v1214 = vld [vmem:[%s1205 + $0x40] sm:$0xff]
    %v1215 = vld [vmem:[%s1205 + $0x48] sm:$0xff]
    %v1216 = vld [vmem:[%s1205 + $0x50] sm:$0xff]
    %v1217 = vld [vmem:[%s1205 + $0x58] sm:$0xff]
    %v1218 = vld [vmem:[%s1205 + $0x60] sm:$0xff]
    %v1219 = vld [vmem:[%s1205 + $0x68] sm:$0xff]
    %v1220 = vld [vmem:[%s1205 + $0x70] sm:$0xff]
    %v1221 = vld [vmem:[%s1205 + $0x78] sm:$0xff]
    %v1222 = vlaneseq
    %v1223 = vshrl.u32 %v1222, 7
    %v1224 = vsub.s32 0, %v1223
    %v1225 = vrot.slane %v1204, %v1224
    %1226 = vmatprep.subr.mxu0 0.0
    %1227 = vmatpush1.msra.mxu0 %v1206
    %1228 = vmatprep.subr.mxu0 0.0
    %1229 = vmatpush1.msra.mxu0 %v1207
    %1230 = vmatprep.subr.mxu0 0.0
    %1231 = vmatpush1.msra.mxu0 %v1208
    %1232 = vmatprep.subr.mxu0 0.0
    %1233 = vmatpush1.msra.mxu0 %v1209
    %1234 = vmatprep.subr.mxu0 0.0
    %1235 = vmatpush1.msra.mxu0 %v1210
    %1236 = vmatprep.subr.mxu0 0.0
    %1237 = vmatpush1.msra.mxu0 %v1211
    %1238 = vmatprep.subr.mxu0 0.0
    %1239 = vmatpush1.msra.mxu0 %v1212
    %1240 = vmatprep.subr.mxu0 0.0
    %1241 = vmatpush1.msra.mxu0 %v1213
    %1242 = vmatprep.subr.mxu0 0.0
    %1243 = vmatpush1.msra.mxu0 %v1214
    %1244 = vmatprep.subr.mxu0 0.0
    %1245 = vmatpush1.msra.mxu0 %v1215
    %1246 = vmatprep.subr.mxu0 0.0
    %1247 = vmatpush1.msra.mxu0 %v1216
    %1248 = vmatprep.subr.mxu0 0.0
    %1249 = vmatpush1.msra.mxu0 %v1217
    %1250 = vmatprep.subr.mxu0 0.0
    %1251 = vmatpush1.msra.mxu0 %v1218
    %1252 = vmatprep.subr.mxu0 0.0
    %1253 = vmatpush1.msra.mxu0 %v1219
    %1254 = vmatprep.subr.mxu0 0.0
    %1255 = vmatpush1.msra.mxu0 %v1220
    %1256 = vmatprep.subr.mxu0 0.0
    %1257 = vmatpush1.msra.mxu0 %v1221
    %1258 = vmatprep.subr.mxu0 0.0
    %1259 = vmatpush1.msra.mxu0 0.0
    %1260 = vmatprep.subr.mxu0 0.0
    %1261 = vmatpush1.msra.mxu0 0.0
    %1262 = vmatprep.subr.mxu0 0.0
    %1263 = vmatpush1.msra.mxu0 0.0
    %1264 = vmatprep.subr.mxu0 0.0
    %1265 = vmatpush1.msra.mxu0 0.0
    %1266 = vmatprep.subr.mxu0 0.0
    %1267 = vmatpush1.msra.mxu0 0.0
    %1268 = vmatprep.subr.mxu0 0.0
    %1269 = vmatpush1.msra.mxu0 0.0
    %1270 = vmatprep.subr.mxu0 0.0
    %1271 = vmatpush1.msra.mxu0 0.0
    %1272 = vmatprep.subr.mxu0 0.0
    %1273 = vmatpush1.msra.mxu0 0.0
    %1274 = vmatprep.subr.mxu0 0.0
    %1275 = vmatpush1.msra.mxu0 0.0
    %1276 = vmatprep.subr.mxu0 0.0
    %1277 = vmatpush1.msra.mxu0 0.0
    %1278 = vmatprep.subr.mxu0 0.0
    %1279 = vmatpush1.msra.mxu0 0.0
    %1280 = vmatprep.subr.mxu0 0.0
    %1281 = vmatpush1.msra.mxu0 0.0
    %1282 = vmatprep.subr.mxu0 0.0
    %1283 = vmatpush1.msra.mxu0 0.0
    %1284 = vmatprep.subr.mxu0 0.0
    %1285 = vmatpush1.msra.mxu0 0.0
    %1286 = vmatprep.subr.mxu0 0.0
    %1287 = vmatpush1.msra.mxu0 0.0
    %1288 = vmatprep.subr.mxu0 0.0
    %1289 = vmatpush1.msra.mxu0 0.0
    %1290 = vmatprep.mubr.f32.mxu0 0.0
    %1291 = vmatmul.mubr.f32.gmra.mrb[0].mxu0 %v1201
    %v1292 = vpop.f32.mrb[0].mxu0
    %v1293 = vadd.f32 %v1225, %v1292
    %v1294 = vpop.f32.mrb[0].mxu0
    %1295 = vmatprep.mubr.f32.mxu0 0.0
    %1296 = vmatmul.mubr.f32.gmra.mrb[0].mxu0 %v1202
    %v1297 = vpop.f32.mrb[0].mxu0
    %v1298 = vadd.f32 %v1225, %v1297
    %v1299 = vpop.f32.mrb[0].mxu0
    %1300 = vdwg.mxu0
    %v1301 = vpack.c.bf16 %v1298, %v1293
    %1302 = vmatprep.subr.bf16.mxu0 0
    %1303 = vmatpush1.bf16.msra.mxu0 %v1301
    %1304 = vmatprep.subr.bf16.mxu0 0
    %1305 = vmatpush1.bf16.msra.mxu0 0
    %1306 = vmatprep.subr.bf16.mxu0 0
    %1307 = vmatpush1.bf16.msra.mxu0 0
    %1308 = vmatprep.subr.bf16.mxu0 0
    %1309 = vmatpush1.bf16.msra.mxu0 0
    %1310 = vmatprep.subr.bf16.mxu0 0
    %1311 = vmatpush1.bf16.msra.mxu0 0
    %1312 = vmatprep.subr.bf16.mxu0 0
    %1313 = vmatpush1.bf16.msra.mxu0 0
    %1314 = vmatprep.subr.bf16.mxu0 0
    %1315 = vmatpush1.bf16.msra.mxu0 0
    %1316 = vmatprep.subr.bf16.mxu0 0
    %1317 = vmatpush1.bf16.msra.mxu0 0
    %1318 = vmatprep.subr.bf16.mxu0 0
    %1319 = vmatpush1.bf16.msra.mxu0 0
    %1320 = vmatprep.subr.bf16.mxu0 0
    %1321 = vmatpush1.bf16.msra.mxu0 0
    %1322 = vmatprep.subr.bf16.mxu0 0
    %1323 = vmatpush1.bf16.msra.mxu0 0
    %1324 = vmatprep.subr.bf16.mxu0 0
    %1325 = vmatpush1.bf16.msra.mxu0 0
    %1326 = vmatprep.subr.bf16.mxu0 0
    %1327 = vmatpush1.bf16.msra.mxu0 0
    %1328 = vmatprep.subr.bf16.mxu0 0
    %1329 = vmatpush1.bf16.msra.mxu0 0
    %1330 = vmatprep.subr.bf16.mxu0 0
    %1331 = vmatpush1.bf16.msra.mxu0 0
    %1332 = vmatprep.subr.bf16.mxu0 0
    %1333 = vmatpush1.bf16.msra.mxu0 0
    %1334 = vmatprep.mubr.bf16.mxu0 0
    %1335 = vmatmul.mubr.bf16.gmra.mrb[0].mxu0 %v540
    %v1336 = vpop.f32.mrb[0].mxu0
    %v1337 = vadd.f32 %v403, %v1336
    %v1338 = vpop.f32.mrb[0].mxu0
    %v1339 = vpop.f32.mrb[0].mxu0
    %v1340 = vadd.f32 %v408, %v1339
    %v1341 = vpop.f32.mrb[0].mxu0
    %1342 = vmatprep.mubr.bf16.mxu0 0
    %1343 = vmatmul.mubr.bf16.gmra.mrb[0].mxu0 %v543
    %v1344 = vpop.f32.mrb[0].mxu0
    %v1345 = vadd.f32 %v413, %v1344
    %v1346 = vpop.f32.mrb[0].mxu0
    %v1347 = vpop.f32.mrb[0].mxu0
    %v1348 = vadd.f32 %v418, %v1347
    %v1349 = vpop.f32.mrb[0].mxu0
    %1350 = vmatprep.mubr.bf16.mxu0 0
    %1351 = vmatmul.mubr.bf16.gmra.mrb[0].mxu0 %v546
    %v1352 = vpop.f32.mrb[0].mxu0
    %v1353 = vadd.f32 %v423, %v1352
    %v1354 = vpop.f32.mrb[0].mxu0
    %v1355 = vpop.f32.mrb[0].mxu0
    %v1356 = vpop.f32.mrb[0].mxu0
    %1357 = vdwg.mxu0
    %v1358 = vmax.f32 %v1337, 0.0
    %v1359 = vmax.f32 %v1340, 0.0
    %v1360 = vmax.f32 %v1345, 0.0
    %v1361 = vmax.f32 %v1348, 0.0
    %v1362 = vmax.f32 %v1353, 0.0
    %v1363 = vmul.f32 %v1358, %v612
    %v1364 = vmul.f32 %v1359, %v617
    %v1365 = vmul.f32 %v1360, %v622
    %v1366 = vmul.f32 %v1361, %v627
    %v1367 = vmul.f32 %v1362, %v632
    %v1368 = vpack.c.bf16 %v1364, %v1363
    %v1369 = vpack.c.bf16 %v1366, %v1365
    %v1370 = vpack.c.bf16 %v1367, %v1367
    %v1372 = vsel %vm237, %v1370, 0
    %1374 = vmatprep.subr.bf16.mxu0 0
    %1375 = vmatpush1.bf16.msra.mxu0 %v1368
    %1376 = vmatprep.subr.bf16.mxu0 0
    %1377 = vmatpush1.bf16.msra.mxu0 %v1369
    %1378 = vmatprep.subr.bf16.mxu0 0
    %1379 = vmatpush1.bf16.msra.mxu0 %v1372
    %1380 = vmatprep.subr.bf16.mxu0 0
    %1381 = vmatpush1.bf16.msra.mxu0 0
    %1382 = vmatprep.subr.bf16.mxu0 0
    %1383 = vmatpush1.bf16.msra.mxu0 0
    %1384 = vmatprep.subr.bf16.mxu0 0
    %1385 = vmatpush1.bf16.msra.mxu0 0
    %1386 = vmatprep.subr.bf16.mxu0 0
    %1387 = vmatpush1.bf16.msra.mxu0 0
    %1388 = vmatprep.subr.bf16.mxu0 0
    %1389 = vmatpush1.bf16.msra.mxu0 0
    %1390 = vmatprep.subr.bf16.mxu0 0
    %1391 = vmatpush1.bf16.msra.mxu0 0
    %1392 = vmatprep.subr.bf16.mxu0 0
    %1393 = vmatpush1.bf16.msra.mxu0 0
    %1394 = vmatprep.subr.bf16.mxu0 0
    %1395 = vmatpush1.bf16.msra.mxu0 0
    %1396 = vmatprep.subr.bf16.mxu0 0
    %1397 = vmatpush1.bf16.msra.mxu0 0
    %1398 = vmatprep.subr.bf16.mxu0 0
    %1399 = vmatpush1.bf16.msra.mxu0 0
    %1400 = vmatprep.subr.bf16.mxu0 0
    %1401 = vmatpush1.bf16.msra.mxu0 0
    %1402 = vmatprep.subr.bf16.mxu0 0
    %1403 = vmatpush1.bf16.msra.mxu0 0
    %1404 = vmatprep.subr.bf16.mxu0 0
    %1405 = vmatpush1.bf16.msra.mxu0 0
    %1406 = vmatprep.mubr.bf16.mxu0 0
    %1407 = vmatmul.mubr.bf16.gmra.mrb[0].mxu0 %v643
    %v1408 = vpop.f32.mrb[0].mxu0
    %v1409 = vadd.f32 0.0, %v1408
    %v1410 = vpop.f32.mrb[0].mxu0
    %v1411 = vpop.f32.mrb[0].mxu0
    %v1412 = vadd.f32 0.0, %v1411
    %v1413 = vpop.f32.mrb[0].mxu0
    %1414 = vdwg.mxu0
    %v1415 = vmul.f32 %v1409, %v79
    %v1416 = vmul.f32 %v1412, %v80
    %v1417 = vlaneseq
    %v1418 = vshrl.u32 %v1417, 7
    %v1419 = vsub.s32 1, %v1418
    %v1420 = vrot.slane %v1204, %v1419
    %v1421 = vadd.f32 %v1293, %v1420
    %v1422 = vadd.f32 %v1298, %v1420
    %v1423 = vmax.f32 %v1421, 0.0
    %v1424 = vmax.f32 %v1422, 0.0
    %v1425 = vmul.f32 %v1423, %v81
    %v1426 = vmul.f32 %v1424, %v82
    %v1427 = vadd.f32 %v1415, %v1425
    %v1428 = vadd.f32 %v1416, %v1426
    %v1429 = vadd.f32 %v1201, %v1427
    %v1430 = vadd.f32 %v1202, %v1428
    %v1431 = vlaneseq
    %v1432 = vshrl.u32 %v1431, 7
    %v1433 = vsub.s32 2, %v1432
    %v1434 = vrot.slane %v1204, %v1433
    %v1435 = vmul.f32 %v1429, %v1434
    %v1436 = vmul.f32 %v1430, %v1434
    %v1437 = vlaneseq
    %v1438 = vshrl.u32 %v1437, 7
    %v1439 = vsub.s32 3, %v1438
    %v1440 = vrot.slane %v1204, %v1439
    %v1441 = vadd.f32 %v1435, %v1440
    %v1442 = vadd.f32 %v1436, %v1440
    %v1443 = vmax.f32 %v1441, 0.0
    %v1444 = vmax.f32 %v1442, 0.0
    %s1445 = scalar_lea.vmem %s5, 16
    %v1446 = vld [vmem:[%s1445] sm:$0xf]
    %s1447 = scalar_lea.vmem [#allocation2], 512
    %v1448 = vld [vmem:[%s1447] sm:$0xff]
    %v1449 = vld [vmem:[%s1447 + $0x8] sm:$0xff]
    %v1450 = vld [vmem:[%s1447 + $0x10] sm:$0xff]
    %v1451 = vld [vmem:[%s1447 + $0x18] sm:$0xff]
    %v1452 = vld [vmem:[%s1447 + $0x20] sm:$0xff]
    %v1453 = vld [vmem:[%s1447 + $0x28] sm:$0xff]
    %v1454 = vld [vmem:[%s1447 + $0x30] sm:$0xff]
    %v1455 = vld [vmem:[%s1447 + $0x38] sm:$0xff]
    %v1456 = vld [vmem:[%s1447 + $0x40] sm:$0xff]
    %v1457 = vld [vmem:[%s1447 + $0x48] sm:$0xff]
    %v1458 = vld [vmem:[%s1447 + $0x50] sm:$0xff]
    %v1459 = vld [vmem:[%s1447 + $0x58] sm:$0xff]
    %v1460 = vld [vmem:[%s1447 + $0x60] sm:$0xff]
    %v1461 = vld [vmem:[%s1447 + $0x68] sm:$0xff]
    %v1462 = vld [vmem:[%s1447 + $0x70] sm:$0xff]
    %v1463 = vld [vmem:[%s1447 + $0x78] sm:$0xff]
    %v1464 = vlaneseq
    %v1465 = vshrl.u32 %v1464, 7
    %v1466 = vsub.s32 0, %v1465
    %v1467 = vrot.slane %v1446, %v1466
    %1468 = vmatprep.subr.mxu0 0.0
    %1469 = vmatpush1.msra.mxu0 %v1448
    %1470 = vmatprep.subr.mxu0 0.0
    %1471 = vmatpush1.msra.mxu0 %v1449
    %1472 = vmatprep.subr.mxu0 0.0
    %1473 = vmatpush1.msra.mxu0 %v1450
    %1474 = vmatprep.subr.mxu0 0.0
    %1475 = vmatpush1.msra.mxu0 %v1451
    %1476 = vmatprep.subr.mxu0 0.0
    %1477 = vmatpush1.msra.mxu0 %v1452
    %1478 = vmatprep.subr.mxu0 0.0
    %1479 = vmatpush1.msra.mxu0 %v1453
    %1480 = vmatprep.subr.mxu0 0.0
    %1481 = vmatpush1.msra.mxu0 %v1454
    %1482 = vmatprep.subr.mxu0 0.0
    %1483 = vmatpush1.msra.mxu0 %v1455
    %1484 = vmatprep.subr.mxu0 0.0
    %1485 = vmatpush1.msra.mxu0 %v1456
    %1486 = vmatprep.subr.mxu0 0.0
    %1487 = vmatpush1.msra.mxu0 %v1457
    %1488 = vmatprep.subr.mxu0 0.0
    %1489 = vmatpush1.msra.mxu0 %v1458
    %1490 = vmatprep.subr.mxu0 0.0
    %1491 = vmatpush1.msra.mxu0 %v1459
    %1492 = vmatprep.subr.mxu0 0.0
    %1493 = vmatpush1.msra.mxu0 %v1460
    %1494 = vmatprep.subr.mxu0 0.0
    %1495 = vmatpush1.msra.mxu0 %v1461
    %1496 = vmatprep.subr.mxu0 0.0
    %1497 = vmatpush1.msra.mxu0 %v1462
    %1498 = vmatprep.subr.mxu0 0.0
    %1499 = vmatpush1.msra.mxu0 %v1463
    %1500 = vmatprep.subr.mxu0 0.0
    %1501 = vmatpush1.msra.mxu0 0.0
    %1502 = vmatprep.subr.mxu0 0.0
    %1503 = vmatpush1.msra.mxu0 0.0
    %1504 = vmatprep.subr.mxu0 0.0
    %1505 = vmatpush1.msra.mxu0 0.0
    %1506 = vmatprep.subr.mxu0 0.0
    %1507 = vmatpush1.msra.mxu0 0.0
    %1508 = vmatprep.subr.mxu0 0.0
    %1509 = vmatpush1.msra.mxu0 0.0
    %1510 = vmatprep.subr.mxu0 0.0
    %1511 = vmatpush1.msra.mxu0 0.0
    %1512 = vmatprep.subr.mxu0 0.0
    %1513 = vmatpush1.msra.mxu0 0.0
    %1514 = vmatprep.subr.mxu0 0.0
    %1515 = vmatpush1.msra.mxu0 0.0
    %1516 = vmatprep.subr.mxu0 0.0
    %1517 = vmatpush1.msra.mxu0 0.0
    %1518 = vmatprep.subr.mxu0 0.0
    %1519 = vmatpush1.msra.mxu0 0.0
    %1520 = vmatprep.subr.mxu0 0.0
    %1521 = vmatpush1.msra.mxu0 0.0
    %1522 = vmatprep.subr.mxu0 0.0
    %1523 = vmatpush1.msra.mxu0 0.0
    %1524 = vmatprep.subr.mxu0 0.0
    %1525 = vmatpush1.msra.mxu0 0.0
    %1526 = vmatprep.subr.mxu0 0.0
    %1527 = vmatpush1.msra.mxu0 0.0
    %1528 = vmatprep.subr.mxu0 0.0
    %1529 = vmatpush1.msra.mxu0 0.0
    %1530 = vmatprep.subr.mxu0 0.0
    %1531 = vmatpush1.msra.mxu0 0.0
    %1532 = vmatprep.mubr.f32.mxu0 0.0
    %1533 = vmatmul.mubr.f32.gmra.mrb[0].mxu0 %v1443
    %v1534 = vpop.f32.mrb[0].mxu0
    %v1535 = vadd.f32 %v1467, %v1534
    %v1536 = vpop.f32.mrb[0].mxu0
    %1537 = vmatprep.mubr.f32.mxu0 0.0
    %1538 = vmatmul.mubr.f32.gmra.mrb[0].mxu0 %v1444
    %v1539 = vpop.f32.mrb[0].mxu0
    %v1540 = vadd.f32 %v1467, %v1539
    %v1541 = vpop.f32.mrb[0].mxu0
    %1542 = vdwg.mxu0
    %v1543 = vpack.c.bf16 %v1540, %v1535
    %1544 = vmatprep.subr.bf16.mxu0 0
    %1545 = vmatpush1.bf16.msra.mxu0 %v1543
    %1546 = vmatprep.subr.bf16.mxu0 0
    %1547 = vmatpush1.bf16.msra.mxu0 0
    %1548 = vmatprep.subr.bf16.mxu0 0
    %1549 = vmatpush1.bf16.msra.mxu0 0
    %1550 = vmatprep.subr.bf16.mxu0 0
    %1551 = vmatpush1.bf16.msra.mxu0 0
    %1552 = vmatprep.subr.bf16.mxu0 0
    %1553 = vmatpush1.bf16.msra.mxu0 0
    %1554 = vmatprep.subr.bf16.mxu0 0
    %1555 = vmatpush1.bf16.msra.mxu0 0
    %1556 = vmatprep.subr.bf16.mxu0 0
    %1557 = vmatpush1.bf16.msra.mxu0 0
    %1558 = vmatprep.subr.bf16.mxu0 0
    %1559 = vmatpush1.bf16.msra.mxu0 0
    %1560 = vmatprep.subr.bf16.mxu0 0
    %1561 = vmatpush1.bf16.msra.mxu0 0
    %1562 = vmatprep.subr.bf16.mxu0 0
    %1563 = vmatpush1.bf16.msra.mxu0 0
    %1564 = vmatprep.subr.bf16.mxu0 0
    %1565 = vmatpush1.bf16.msra.mxu0 0
    %1566 = vmatprep.subr.bf16.mxu0 0
    %1567 = vmatpush1.bf16.msra.mxu0 0
    %1568 = vmatprep.subr.bf16.mxu0 0
    %1569 = vmatpush1.bf16.msra.mxu0 0
    %1570 = vmatprep.subr.bf16.mxu0 0
    %1571 = vmatpush1.bf16.msra.mxu0 0
    %1572 = vmatprep.subr.bf16.mxu0 0
    %1573 = vmatpush1.bf16.msra.mxu0 0
    %1574 = vmatprep.subr.bf16.mxu0 0
    %1575 = vmatpush1.bf16.msra.mxu0 0
    %1576 = vmatprep.mubr.bf16.mxu0 0
    %1577 = vmatmul.mubr.bf16.gmra.mrb[0].mxu0 %v540
    %v1578 = vpop.f32.mrb[0].mxu0
    %v1579 = vadd.f32 %v403, %v1578
    %v1580 = vpop.f32.mrb[0].mxu0
    %v1581 = vpop.f32.mrb[0].mxu0
    %v1582 = vadd.f32 %v408, %v1581
    %v1583 = vpop.f32.mrb[0].mxu0
    %1584 = vmatprep.mubr.bf16.mxu0 0
    %1585 = vmatmul.mubr.bf16.gmra.mrb[0].mxu0 %v543
    %v1586 = vpop.f32.mrb[0].mxu0
    %v1587 = vadd.f32 %v413, %v1586
    %v1588 = vpop.f32.mrb[0].mxu0
    %v1589 = vpop.f32.mrb[0].mxu0
    %v1590 = vadd.f32 %v418, %v1589
    %v1591 = vpop.f32.mrb[0].mxu0
    %1592 = vmatprep.mubr.bf16.mxu0 0
    %1593 = vmatmul.mubr.bf16.gmra.mrb[0].mxu0 %v546
    %v1594 = vpop.f32.mrb[0].mxu0
    %v1595 = vadd.f32 %v423, %v1594
    %v1596 = vpop.f32.mrb[0].mxu0
    %v1597 = vpop.f32.mrb[0].mxu0
    %v1598 = vpop.f32.mrb[0].mxu0
    %1599 = vdwg.mxu0
    %v1600 = vmax.f32 %v1579, 0.0
    %v1601 = vmax.f32 %v1582, 0.0
    %v1602 = vmax.f32 %v1587, 0.0
    %v1603 = vmax.f32 %v1590, 0.0
    %v1604 = vmax.f32 %v1595, 0.0
    %v1605 = vmul.f32 %v1600, %v612
    %v1606 = vmul.f32 %v1601, %v617
    %v1607 = vmul.f32 %v1602, %v622
    %v1608 = vmul.f32 %v1603, %v627
    %v1609 = vmul.f32 %v1604, %v632
    %v1610 = vpack.c.bf16 %v1606, %v1605
    %v1611 = vpack.c.bf16 %v1608, %v1607
    %v1612 = vpack.c.bf16 %v1609, %v1609
    %v1614 = vsel %vm237, %v1612, 0
    %1616 = vmatprep.subr.bf16.mxu0 0
    %1617 = vmatpush1.bf16.msra.mxu0 %v1610
    %1618 = vmatprep.subr.bf16.mxu0 0
    %1619 = vmatpush1.bf16.msra.mxu0 %v1611
    %1620 = vmatprep.subr.bf16.mxu0 0
    %1621 = vmatpush1.bf16.msra.mxu0 %v1614
    %1622 = vmatprep.subr.bf16.mxu0 0
    %1623 = vmatpush1.bf16.msra.mxu0 0
    %1624 = vmatprep.subr.bf16.mxu0 0
    %1625 = vmatpush1.bf16.msra.mxu0 0
    %1626 = vmatprep.subr.bf16.mxu0 0
    %1627 = vmatpush1.bf16.msra.mxu0 0
    %1628 = vmatprep.subr.bf16.mxu0 0
    %1629 = vmatpush1.bf16.msra.mxu0 0
    %1630 = vmatprep.subr.bf16.mxu0 0
    %1631 = vmatpush1.bf16.msra.mxu0 0
    %1632 = vmatprep.subr.bf16.mxu0 0
    %1633 = vmatpush1.bf16.msra.mxu0 0
    %1634 = vmatprep.subr.bf16.mxu0 0
    %1635 = vmatpush1.bf16.msra.mxu0 0
    %1636 = vmatprep.subr.bf16.mxu0 0
    %1637 = vmatpush1.bf16.msra.mxu0 0
    %1638 = vmatprep.subr.bf16.mxu0 0
    %1639 = vmatpush1.bf16.msra.mxu0 0
    %1640 = vmatprep.subr.bf16.mxu0 0
    %1641 = vmatpush1.bf16.msra.mxu0 0
    %1642 = vmatprep.subr.bf16.mxu0 0
    %1643 = vmatpush1.bf16.msra.mxu0 0
    %1644 = vmatprep.subr.bf16.mxu0 0
    %1645 = vmatpush1.bf16.msra.mxu0 0
    %1646 = vmatprep.subr.bf16.mxu0 0
    %1647 = vmatpush1.bf16.msra.mxu0 0
    %1648 = vmatprep.mubr.bf16.mxu0 0
    %1649 = vmatmul.mubr.bf16.gmra.mrb[0].mxu0 %v643
    %v1650 = vpop.f32.mrb[0].mxu0
    %v1651 = vadd.f32 0.0, %v1650
    %v1652 = vpop.f32.mrb[0].mxu0
    %v1653 = vpop.f32.mrb[0].mxu0
    %v1654 = vadd.f32 0.0, %v1653
    %v1655 = vpop.f32.mrb[0].mxu0
    %1656 = vdwg.mxu0
    %v1657 = vmul.f32 %v1651, %v79
    %v1658 = vmul.f32 %v1654, %v80
    %v1659 = vlaneseq
    %v1660 = vshrl.u32 %v1659, 7
    %v1661 = vsub.s32 1, %v1660
    %v1662 = vrot.slane %v1446, %v1661
    %v1663 = vadd.f32 %v1535, %v1662
    %v1664 = vadd.f32 %v1540, %v1662
    %v1665 = vmax.f32 %v1663, 0.0
    %v1666 = vmax.f32 %v1664, 0.0
    %v1667 = vmul.f32 %v1665, %v81
    %v1668 = vmul.f32 %v1666, %v82
    %v1669 = vadd.f32 %v1657, %v1667
    %v1670 = vadd.f32 %v1658, %v1668
    %v1671 = vadd.f32 %v1443, %v1669
    %v1672 = vadd.f32 %v1444, %v1670
    %v1673 = vlaneseq
    %v1674 = vshrl.u32 %v1673, 7
    %v1675 = vsub.s32 2, %v1674
    %v1676 = vrot.slane %v1446, %v1675
    %v1677 = vmul.f32 %v1671, %v1676
    %v1678 = vmul.f32 %v1672, %v1676
    %v1679 = vlaneseq
    %v1680 = vshrl.u32 %v1679, 7
    %v1681 = vsub.s32 3, %v1680
    %v1682 = vrot.slane %v1446, %v1681
    %v1683 = vadd.f32 %v1677, %v1682
    %v1684 = vadd.f32 %v1678, %v1682
    %v1685 = vlaneseq
    %v1686 = vshrl.u32 %v1685, 7
    %v1687 = vsub.s32 2, %v1686
    %v1688 = vrot.slane %v44, %v1687
    %vm1689 = vcmp.eq.s32.totalorder %v1688, %v46
    %v1690 = vsel %vm1689, 1, 0
    %v1691 = vcvt.s32.f32 %v1690
    %vm1692 = vcmask 123904
    %v1693 = vsel %vm1692, %v1691, 0.0
    %1694 = vadd.xlane.f32.xlu0 %v1693
    %v1695 = vpop.xlane.xlu0 %1694
    %v1696 = vmax.f32 %v1695, 1.0
    %v1697 = vpack.c.bf16 %v1691, %v1691
    %v1698 = vpack.c.bf16 %v1684, %v1683
    %v1700 = vsel %vm115, %v1697, 0
    %1702 = vmatprep.subr.bf16.mxu0 0
    %1703 = vmatpush1.bf16.msra.mxu0 %v1698
    %1704 = vmatprep.subr.bf16.mxu0 0
    %1705 = vmatpush1.bf16.msra.mxu0 0
    %1706 = vmatprep.subr.bf16.mxu0 0
    %1707 = vmatpush1.bf16.msra.mxu0 0
    %1708 = vmatprep.subr.bf16.mxu0 0
    %1709 = vmatpush1.bf16.msra.mxu0 0
    %1710 = vmatprep.subr.bf16.mxu0 0
    %1711 = vmatpush1.bf16.msra.mxu0 0
    %1712 = vmatprep.subr.bf16.mxu0 0
    %1713 = vmatpush1.bf16.msra.mxu0 0
    %1714 = vmatprep.subr.bf16.mxu0 0
    %1715 = vmatpush1.bf16.msra.mxu0 0
    %1716 = vmatprep.subr.bf16.mxu0 0
    %1717 = vmatpush1.bf16.msra.mxu0 0
    %1718 = vmatprep.subr.bf16.mxu0 0
    %1719 = vmatpush1.bf16.msra.mxu0 0
    %1720 = vmatprep.subr.bf16.mxu0 0
    %1721 = vmatpush1.bf16.msra.mxu0 0
    %1722 = vmatprep.subr.bf16.mxu0 0
    %1723 = vmatpush1.bf16.msra.mxu0 0
    %1724 = vmatprep.subr.bf16.mxu0 0
    %1725 = vmatpush1.bf16.msra.mxu0 0
    %1726 = vmatprep.subr.bf16.mxu0 0
    %1727 = vmatpush1.bf16.msra.mxu0 0
    %1728 = vmatprep.subr.bf16.mxu0 0
    %1729 = vmatpush1.bf16.msra.mxu0 0
    %1730 = vmatprep.subr.bf16.mxu0 0
    %1731 = vmatpush1.bf16.msra.mxu0 0
    %1732 = vmatprep.subr.bf16.mxu0 0
    %1733 = vmatpush1.bf16.msra.mxu0 0
    %1734 = vmatprep.mubr.bf16.mxu0 0
    %1735 = vmatmul.mubr.bf16.gmra.mrb[0].mxu0 %v1700
    %v1736 = vpop.f32.mrb[0].mxu0
    %v1737 = vadd.f32 0.0, %v1736
    %v1738 = vpop.f32.mrb[0].mxu0
    %v1739 = vpop.f32.mrb[0].mxu0
    %v1740 = vpop.f32.mrb[0].mxu0
    %1741 = vdwg.mxu0
    %v1742 = vrcp.pop %v1696
    %v1743 = vmul.f32 %v1737, %v1742
    %v1744 = vld [vmem:[%s6] sm:$0xff]
    %v1745 = vld [vmem:[%s6 + $0x8] sm:$0xff]
    %v1746 = vld [vmem:[%s6 + $0x10] sm:$0xff]
    %v1747 = vld [vmem:[%s6 + $0x18] sm:$0xff]
    %v1748 = vld [vmem:[%s6 + $0x20] sm:$0xff]
    %v1749 = vld [vmem:[%s6 + $0x28] sm:$0xff]
    %v1750 = vld [vmem:[%s6 + $0x30] sm:$0xff]
    %v1751 = vld [vmem:[%s6 + $0x38] sm:$0xff]
    %v1752 = vld [vmem:[%s6 + $0x40] sm:$0xff]
    %v1753 = vld [vmem:[%s6 + $0x48] sm:$0xff]
    %v1754 = vld [vmem:[%s6 + $0x50] sm:$0xff]
    %v1755 = vld [vmem:[%s6 + $0x58] sm:$0xff]
    %v1756 = vld [vmem:[%s6 + $0x60] sm:$0xff]
    %v1757 = vld [vmem:[%s6 + $0x68] sm:$0xff]
    %v1758 = vld [vmem:[%s6 + $0x70] sm:$0xff]
    %v1759 = vld [vmem:[%s6 + $0x78] sm:$0xff]
    %v1760 = vld [vmem:[%s6 + $0x80] sm:$0xff]
    %v1761 = vld [vmem:[%s6 + $0x88] sm:$0xff]
    %v1762 = vld [vmem:[%s6 + $0x90] sm:$0xff]
    %v1763 = vld [vmem:[%s6 + $0x98] sm:$0xff]
    %v1764 = vld [vmem:[%s6 + $0xa0] sm:$0xff]
    %v1765 = vld [vmem:[%s6 + $0xa8] sm:$0xff]
    %v1766 = vld [vmem:[%s6 + $0xb0] sm:$0xff]
    %v1767 = vld [vmem:[%s6 + $0xb8] sm:$0xff]
    %v1768 = vld [vmem:[%s7] sm:$0xf]
    %v1769 = vlaneseq
    %v1770 = vshrl.u32 %v1769, 7
    %v1771 = vsub.s32 0, %v1770
    %v1772 = vrot.slane %v1768, %v1771
    %1773 = vmatprep.subr.mxu0 0.0
    %1774 = vmatpush1.msra.mxu0 %v1744
    %1775 = vmatprep.subr.mxu0 0.0
    %1776 = vmatpush1.msra.mxu0 %v1745
    %1777 = vmatprep.subr.mxu0 0.0
    %1778 = vmatpush1.msra.mxu0 %v1746
    %1779 = vmatprep.subr.mxu0 0.0
    %1780 = vmatpush1.msra.mxu0 %v1747
    %1781 = vmatprep.subr.mxu0 0.0
    %1782 = vmatpush1.msra.mxu0 %v1748
    %1783 = vmatprep.subr.mxu0 0.0
    %1784 = vmatpush1.msra.mxu0 %v1749
    %1785 = vmatprep.subr.mxu0 0.0
    %1786 = vmatpush1.msra.mxu0 %v1750
    %1787 = vmatprep.subr.mxu0 0.0
    %1788 = vmatpush1.msra.mxu0 %v1751
    %1789 = vmatprep.subr.mxu0 0.0
    %1790 = vmatpush1.msra.mxu0 %v1752
    %1791 = vmatprep.subr.mxu0 0.0
    %1792 = vmatpush1.msra.mxu0 %v1753
    %1793 = vmatprep.subr.mxu0 0.0
    %1794 = vmatpush1.msra.mxu0 %v1754
    %1795 = vmatprep.subr.mxu0 0.0
    %1796 = vmatpush1.msra.mxu0 %v1755
    %1797 = vmatprep.subr.mxu0 0.0
    %1798 = vmatpush1.msra.mxu0 %v1756
    %1799 = vmatprep.subr.mxu0 0.0
    %1800 = vmatpush1.msra.mxu0 %v1757
    %1801 = vmatprep.subr.mxu0 0.0
    %1802 = vmatpush1.msra.mxu0 %v1758
    %1803 = vmatprep.subr.mxu0 0.0
    %1804 = vmatpush1.msra.mxu0 %v1759
    %1805 = vmatprep.subr.mxu0 0.0
    %1806 = vmatpush1.msra.mxu0 0.0
    %1807 = vmatprep.subr.mxu0 0.0
    %1808 = vmatpush1.msra.mxu0 0.0
    %1809 = vmatprep.subr.mxu0 0.0
    %1810 = vmatpush1.msra.mxu0 0.0
    %1811 = vmatprep.subr.mxu0 0.0
    %1812 = vmatpush1.msra.mxu0 0.0
    %1813 = vmatprep.subr.mxu0 0.0
    %1814 = vmatpush1.msra.mxu0 0.0
    %1815 = vmatprep.subr.mxu0 0.0
    %1816 = vmatpush1.msra.mxu0 0.0
    %1817 = vmatprep.subr.mxu0 0.0
    %1818 = vmatpush1.msra.mxu0 0.0
    %1819 = vmatprep.subr.mxu0 0.0
    %1820 = vmatpush1.msra.mxu0 0.0
    %1821 = vmatprep.subr.mxu0 0.0
    %1822 = vmatpush1.msra.mxu0 0.0
    %1823 = vmatprep.subr.mxu0 0.0
    %1824 = vmatpush1.msra.mxu0 0.0
    %1825 = vmatprep.subr.mxu0 0.0
    %1826 = vmatpush1.msra.mxu0 0.0
    %1827 = vmatprep.subr.mxu0 0.0
    %1828 = vmatpush1.msra.mxu0 0.0
    %1829 = vmatprep.subr.mxu0 0.0
    %1830 = vmatpush1.msra.mxu0 0.0
    %1831 = vmatprep.subr.mxu0 0.0
    %1832 = vmatpush1.msra.mxu0 0.0
    %1833 = vmatprep.subr.mxu0 0.0
    %1834 = vmatpush1.msra.mxu0 0.0
    %1835 = vmatprep.subr.mxu0 0.0
    %1836 = vmatpush1.msra.mxu0 0.0
    %1837 = vmatprep.mubr.f32.mxu0 0.0
    %1838 = vmatmul.mubr.f32.gmra.mrb[0].mxu0 %v1743
    %v1839 = vpop.f32.mrb[0].mxu0
    %v1840 = vadd.f32 %v1772, %v1839
    %v1841 = vpop.f32.mrb[0].mxu0
    %1842 = vdwg.mxu0
    %v1843 = vmax.f32 %v1840, 0.0
    %v1844 = vlaneseq
    %v1845 = vshrl.u32 %v1844, 7
    %v1846 = vsub.s32 1, %v1845
    %v1847 = vrot.slane %v1768, %v1846
    %vm1848 = vcmask 523264
    %v1850 = vsel %vm1848, %v1843, 0
    %1852 = vmatprep.subr.mxu0 0.0
    %1853 = vmatpush1.msra.mxu0 %v1760
    %1854 = vmatprep.subr.mxu0 0.0
    %1855 = vmatpush1.msra.mxu0 %v1761
    %1856 = vmatprep.subr.mxu0 0.0
    %1857 = vmatpush1.msra.mxu0 %v1762
    %1858 = vmatprep.subr.mxu0 0.0
    %1859 = vmatpush1.msra.mxu0 %v1763
    %1860 = vmatprep.subr.mxu0 0.0
    %1861 = vmatpush1.msra.mxu0 %v1764
    %1862 = vmatprep.subr.mxu0 0.0
    %1863 = vmatpush1.msra.mxu0 %v1765
    %1864 = vmatprep.subr.mxu0 0.0
    %1865 = vmatpush1.msra.mxu0 %v1766
    %1866 = vmatprep.subr.mxu0 0.0
    %1867 = vmatpush1.msra.mxu0 %v1767
    %1868 = vmatprep.subr.mxu0 0.0
    %1869 = vmatpush1.msra.mxu0 0.0
    %1870 = vmatprep.subr.mxu0 0.0
    %1871 = vmatpush1.msra.mxu0 0.0
    %1872 = vmatprep.subr.mxu0 0.0
    %1873 = vmatpush1.msra.mxu0 0.0
    %1874 = vmatprep.subr.mxu0 0.0
    %1875 = vmatpush1.msra.mxu0 0.0
    %1876 = vmatprep.subr.mxu0 0.0
    %1877 = vmatpush1.msra.mxu0 0.0
    %1878 = vmatprep.subr.mxu0 0.0
    %1879 = vmatpush1.msra.mxu0 0.0
    %1880 = vmatprep.subr.mxu0 0.0
    %1881 = vmatpush1.msra.mxu0 0.0
    %1882 = vmatprep.subr.mxu0 0.0
    %1883 = vmatpush1.msra.mxu0 0.0
    %1884 = vmatprep.subr.mxu0 0.0
    %1885 = vmatpush1.msra.mxu0 0.0
    %1886 = vmatprep.subr.mxu0 0.0
    %1887 = vmatpush1.msra.mxu0 0.0
    %1888 = vmatprep.subr.mxu0 0.0
    %1889 = vmatpush1.msra.mxu0 0.0
    %1890 = vmatprep.subr.mxu0 0.0
    %1891 = vmatpush1.msra.mxu0 0.0
    %1892 = vmatprep.subr.mxu0 0.0
    %1893 = vmatpush1.msra.mxu0 0.0
    %1894 = vmatprep.subr.mxu0 0.0
    %1895 = vmatpush1.msra.mxu0 0.0
    %1896 = vmatprep.subr.mxu0 0.0
    %1897 = vmatpush1.msra.mxu0 0.0
    %1898 = vmatprep.subr.mxu0 0.0
    %1899 = vmatpush1.msra.mxu0 0.0
    %1900 = vmatprep.subr.mxu0 0.0
    %1901 = vmatpush1.msra.mxu0 0.0
    %1902 = vmatprep.subr.mxu0 0.0
    %1903 = vmatpush1.msra.mxu0 0.0
    %1904 = vmatprep.subr.mxu0 0.0
    %1905 = vmatpush1.msra.mxu0 0.0
    %1906 = vmatprep.subr.mxu0 0.0
    %1907 = vmatpush1.msra.mxu0 0.0
    %1908 = vmatprep.subr.mxu0 0.0
    %1909 = vmatpush1.msra.mxu0 0.0
    %1910 = vmatprep.subr.mxu0 0.0
    %1911 = vmatpush1.msra.mxu0 0.0
    %1912 = vmatprep.subr.mxu0 0.0
    %1913 = vmatpush1.msra.mxu0 0.0
    %1914 = vmatprep.subr.mxu0 0.0
    %1915 = vmatpush1.msra.mxu0 0.0
    %1916 = vmatprep.mubr.f32.mxu0 0.0
    %1917 = vmatmul.mubr.f32.gmra.mrb[0].mxu0 %v1850
    %v1918 = vpop.f32.mrb[0].mxu0
    %v1919 = vadd.f32 %v1847, %v1918
    %v1920 = vpop.f32.mrb[0].mxu0
    %1921 = vdwg.mxu0
    %v1922 = vmax.f32 %v1919, 0.0
    %v1923 = vlaneseq
    %v1924 = vshrl.u32 %v1923, 7
    %v1925 = vsub.s32 2, %v1924
    %v1926 = vrot.slane %v1768, %v1925
    %v1927 = vmul.f32 %v1922, %v1926
    %vm1928 = vcmask 517120
    %v1929 = vsel %vm1928, %v1927, 0.0
    %1930 = vadd.xlane.f32.xlu0 %v1929
    %v1931 = vpop.xlane.xlu0 %1930
    %v1932 = vlaneseq
    %v1933 = vshrl.u32 %v1932, 7
    %v1934 = vsub.s32 3, %v1933
    %v1935 = vrot.slane %v1768, %v1934
    %v1936 = vadd.f32 %v1931, %v1935
    %vm1937 = vcmask 1024
    %1938 = vst.msk [vmem:[%s8] sm:$0x3] %vm1937, %v1936
    // Predicated region
    $region38: #{gcn_forward.1} parent=1 // pred_check
      _
    $region39: #{gcn_forward.1} parent=1 // pred_check_branch
      %1940 = sbr.rel (0) target = $region41
    $region40: #{gcn_forward.1} parent=1 // pred_region
      _
    $region41: #{gcn_forward.1} parent=1 // pred_fallthru
      _
    // Predicated region
    $region42: #{gcn_forward.1} parent=1 // pred_check
      _
    $region43: #{gcn_forward.1} parent=1 // pred_check_branch
      %1942 = sbr.rel (0) target = $region45
    $region44: #{gcn_forward.1} parent=1 // pred_region
      _
    $region45: #{gcn_forward.1} parent=1 // pred_fallthru
      _
    %1943 = vsyncpa [#allocation3], 1

</llo_original>
